<compile_context>
chip_gen: v6e
topology: v6e:2x2x1
jax: 0.10.0
libtpu: 0.0.40
codegen_flags: <defaults>
</compile_context>

<pallas_src>
import functools

import numpy as np

import jax
import jax.numpy as jnp
from jax.experimental import pallas as pl
from jax.experimental.pallas import tpu as pltpu


# ----------------------------------------------------------------------------
# Fused Pallas kernel: the whole Generator forward pass (one sample per step).
# ----------------------------------------------------------------------------
def _generator_kernel(*refs, acts, r, chunk):
    """refs layout:  [z, lw, lb,  (S, A, bias) * n_layers,  out]

       z    : (B, latent)                 f32   (row b picked via program_id)
       lw   : (latent, r*r*h0)            bf16  columns pre-permuted to (h,w,c)
       lb   : (1, r*r*h0)                 f32
       S    : (3, H_out, K)               bf16  0/1 H-upsample/pad/kh-tap gather
       A    : (W_in*C_in, 3*W_out*C_out)  bf16  W-upsample/pad/kw taps + conv W
                                                (BN scale folded), kh-concat on N
       bias : (1, W_out*C_out)            f32   conv bias w/ BN folded, W-tiled
       out  : (H_final, W_final*C_pad)    f32   per-sample output block
    """
    n_layers = len(acts)
    z_ref, lw_ref, lb_ref = refs[0], refs[1], refs[2]
    conv_refs = refs[3:3 + 3 * n_layers]
    o_ref = refs[3 + 3 * n_layers]

    b = pl.program_id(0)

    # ---- Linear: one (1, latent) @ (latent, r*r*h0) dot, f32 accumulation.
    z_row = z_ref[pl.ds(b, 1), :].astype(jnp.bfloat16)            # (1, latent)
    y0 = jnp.dot(z_row, lw_ref[...],
                 preferred_element_type=jnp.float32) + lb_ref[...]  # (1, r*chunk)

    # ---- Scatter the r lane-chunks of y0 into rows (h) of the first
    #      activation.  Rows are padded to r_pad (>= 8) so every later matmul
    #      operand has at least 8 sublanes; pad rows stay exactly zero.
    r_pad = conv_refs[0].shape[2]                     # K-dim of the first S
    row_ids = jax.lax.broadcasted_iota(jnp.int32, (r_pad, 1), 0)
    x = jnp.zeros((r_pad, chunk), jnp.float32)
    for h in range(r):
        onehot = (row_ids == h).astype(jnp.float32)   # (r_pad, 1) one-hot col
        x = x + onehot * y0[:, h * chunk:(h + 1) * chunk]
    x = x.astype(jnp.bfloat16)                        # (r_pad, W0*C0)

    # ---- Conv stack:
    #        y   = x @ A_cat                          (dense, pre-upsample rows)
    #        out = act( sum_kh S_kh @ y[:, kh-block] + bias )
    out = None
    for li, act in enumerate(acts):
        s_ref = conv_refs[3 * li]        # (3, H_out, K)
        a_ref = conv_refs[3 * li + 1]    # (W_in*C_in, 3*W_out*C_out)
        b_ref = conv_refs[3 * li + 2]    # (1, W_out*C_out)
        wo_co = a_ref.shape[1] // 3

        y = jnp.dot(x, a_ref[...], preferred_element_type=jnp.float32)
        y = y.astype(jnp.bfloat16)

        acc = None
        for kh in range(3):
            t = jnp.dot(s_ref[kh], y[:, kh * wo_co:(kh + 1) * wo_co],
                        preferred_element_type=jnp.float32)
            acc = t if acc is None else acc + t
        out = acc + b_ref[...]
        out = jnp.maximum(out, 0.0) if act == "relu" else jnp.tanh(out)
        x = out.astype(jnp.bfloat16)

    o_ref[...] = out                                  # (H_final, W_final*C_pad)


def _const_spec(shape):
    zeros = (0,) * len(shape)
    return pl.BlockSpec(tuple(shape), lambda b, _z=zeros: _z)


# ----------------------------------------------------------------------------
# Host-side builders: fold upsample + pad + 3x3 taps (+ BatchNorm) into mats.
# ----------------------------------------------------------------------------
def _build_conv_mats(w_hwio, bn_scale, W_in, C_in, C_out):
    """(W_in*C_in, 3*W_out*C_out): W-direction nearest-2x upsample, zero pad,
    the three kw taps and the conv weights (BN scale folded), with the three
    kh taps concatenated along the output (N) axis."""
    W_out = 2 * W_in
    w = (np.asarray(w_hwio, np.float32)
         * np.asarray(bn_scale, np.float32)[None, None, None, :])
    A = np.zeros((3, W_in * C_in, W_out * C_out), np.float32)
    for kh in range(3):
        for wo in range(W_out):
            for kw in range(3):
                u = wo + kw - 1                       # col on the upsampled grid
                if 0 <= u < W_out:
                    wi = u // 2                       # nearest-neighbour source
                    A[kh,
                      wi * C_in:(wi + 1) * C_in,
                      wo * C_out:(wo + 1) * C_out] += w[kh, kw]
    return np.concatenate([A[0], A[1], A[2]], axis=1)


def _build_row_gather(H_in, H_out, k_pad):
    """(3, H_out, k_pad) 0/1 matrix = H-direction nearest-2x upsample + zero
    pad + kh-tap row selection.  Batch-independent."""
    S = np.zeros((3, H_out, k_pad), np.float32)
    for kh in range(3):
        for ho in range(H_out):
            u = ho + kh - 1
            if 0 <= u < H_out:
                S[kh, ho, u // 2] = 1.0
    return S


# ----------------------------------------------------------------------------
# Generator (parameters built deterministically in-script)
# ----------------------------------------------------------------------------
class PallasGenerator:
    def __init__(self, key, latent_dim=32, output_channels=3, image_size=32,
                 hidden_layers=(32, 16, 8), starting_res=4, stride=2,
                 use_batchnorm=True):
        hidden_layers = list(hidden_layers)
        assert stride == 2, "fused upsample matrices assume stride == 2"
        num_upsamples = len(hidden_layers[1:]) + 1
        assert starting_res * stride ** num_upsamples == image_size

        self.latent_dim = latent_dim
        self.output_channels = output_channels
        self.image_size = image_size
        self.hidden_layers = hidden_layers
        self.r = starting_res
        self.h0 = hidden_layers[0]
        self.use_batchnorm = use_batchnorm

        # Pad the final channel count so the output slab (and the last matmul
        # N) is a multiple of 128 lanes -> unmasked lane-dense stores.
        c_pad = output_channels
        while (image_size * c_pad) % 128 != 0 and c_pad < output_channels + 8:
            c_pad += 1
        self.c_pad = c_pad

        n_conv = len(hidden_layers)           # hidden[1:] convs + final conv
        keys = jax.random.split(key, 2 + 2 * n_conv)
        kit = iter(keys)

        r, h0 = self.r, self.h0
        dout = h0 * r * r

        # ---- Linear: latent -> h0*r*r  (torch column order is (c, h, w)).
        lin_w = jax.random.normal(next(kit), (latent_dim, dout), jnp.float32) * 0.05
        lin_b = jax.random.normal(next(kit), (dout,), jnp.float32) * 0.05
        self._lin_w_raw, self._lin_b_raw = lin_w, lin_b       # for the reference

        # Permute columns to (h, w, c) so the kernel's row-scatter lane chunks
        # are already in NHWC order (no NCHW->NHWC transpose after the linear).
        perm = np.empty(dout, dtype=np.int64)
        for hh in range(r):
            for ww in range(r):
                for cc in range(h0):
                    perm[hh * r * h0 + ww * h0 + cc] = cc * r * r + hh * r + ww
        self.lw = jnp.asarray(np.asarray(lin_w)[:, perm], jnp.bfloat16)
        self.lb = jnp.asarray(np.asarray(lin_b)[perm][None, :], jnp.float32)

        # ---- Conv stack (BatchNorm folded into A / bias at init).
        eps = 1e-5
        chans = hidden_layers + [output_channels]
        acts, A_list, S_list, bias_list, raw = [], [], [], [], []
        H_in = r
        for li in range(n_conv):
            cin, cout = chans[li], chans[li + 1]
            w = jax.random.normal(next(kit), (3, 3, cin, cout), jnp.float32) * 0.05
            bconv = jax.random.normal(next(kit), (cout,), jnp.float32) * 0.05
            last = (li == n_conv - 1)
            if use_batchnorm and not last:
                # eval-mode BN with init running stats (mean=0, var=1, g=1, b=0)
                scale = np.full((cout,), 1.0 / np.sqrt(1.0 + eps), np.float32)
                shift = np.zeros((cout,), np.float32)
            else:
                scale = np.ones((cout,), np.float32)
                shift = np.zeros((cout,), np.float32)
            act = "tanh" if last else "relu"
            raw.append((w, bconv, jnp.asarray(scale), jnp.asarray(shift), act))

            # zero-pad the final layer's output channels to c_pad
            cout_eff = self.c_pad if last else cout
            w_np = np.asarray(w, np.float32)
            b_np = np.asarray(bconv, np.float32)
            if cout_eff != cout:
                pad = cout_eff - cout
                w_np = np.concatenate(
                    [w_np, np.zeros((3, 3, cin, pad), np.float32)], axis=3)
                b_np = np.concatenate([b_np, np.zeros((pad,), np.float32)])
                scale = np.concatenate([scale, np.ones((pad,), np.float32)])
                shift = np.concatenate([shift, np.zeros((pad,), np.float32)])

            W_in, W_out = H_in, 2 * H_in          # square feature maps
            k_pad = max(H_in, 8) if li == 0 else H_in
            A_list.append(jnp.asarray(
                _build_conv_mats(w_np, scale, W_in, cin, cout_eff), jnp.bfloat16))
            S_list.append(jnp.asarray(
                _build_row_gather(H_in, W_out, k_pad), jnp.bfloat16))
            fused_bias = np.tile(b_np * scale + shift, W_out)[None, :]
            bias_list.append(jnp.asarray(fused_bias, jnp.float32))
            acts.append(act)
            H_in = 2 * H_in

        self.acts = tuple(acts)
        self.A_list = A_list
        self.S_list = S_list
        self.bias_list = bias_list
        self._conv_raw = raw
        self._jit_forward = jax.jit(self._forward)

    # ---- fused forward: one pallas_call, batch on a "parallel" grid axis
    def _forward(self, z):
        B = z.shape[0]
        H = self.image_size
        wcp = H * self.c_pad

        inputs = [z.astype(jnp.float32), self.lw, self.lb]
        for S, A, bias in zip(self.S_list, self.A_list, self.bias_list):
            inputs += [S, A, bias]

        out2d = pl.pallas_call(
            functools.partial(_generator_kernel, acts=self.acts, r=self.r,
                              chunk=self.r * self.h0),
            out_shape=jax.ShapeDtypeStruct((B * H, wcp), jnp.float32),
            grid_spec=pltpu.PrefetchScalarGridSpec(
                num_scalar_prefetch=0,
                grid=(B,),                                    # one sample / step
                in_specs=[_const_spec(a.shape) for a in inputs],
                out_specs=pl.BlockSpec((H, wcp), lambda b: (b, 0)),
            ),
            compiler_params=pltpu.CompilerParams(
                dimension_semantics=("parallel",)),           # 2nd TC on v7x
        )(*inputs)

        x = out2d.reshape(B, H, H, self.c_pad)[..., :self.output_channels]
        return jnp.transpose(x, (0, 3, 1, 2))                 # NHWC -> NCHW

    def __call__(self, z):
        return self._jit_forward(z)

    # ---- pure-JAX f32 reference (XLA only, no Pallas) for correctness check
    def _reference(self, z):
        hp = jax.lax.Precision.HIGHEST
        lin = jnp.dot(z, self._lin_w_raw, precision=hp) + self._lin_b_raw
        B = z.shape[0]
        x = lin.reshape(B, self.h0, self.r, self.r)     # torch .view -> NCHW
        x = jnp.transpose(x, (0, 2, 3, 1))              # -> NHWC
        for (w, b, scale, shift, act) in self._conv_raw:
            x = jnp.repeat(jnp.repeat(x, 2, axis=1), 2, axis=2)   # nearest 2x
            x = jax.lax.conv_general_dilated(
                x, w, window_strides=(1, 1), padding=((1, 1), (1, 1)),
                dimension_numbers=("NHWC", "HWIO", "NHWC"), precision=hp)
            x = (x + b) * scale + shift
            x = jnp.maximum(x, 0.0) if act == "relu" else jnp.tanh(x)
        return jnp.transpose(x, (0, 3, 1, 2))


# ----------------------------------------------------------------------------
if __name__ == "__main__":
    key = jax.random.PRNGKey(0)
    pkey, zkey = jax.random.split(key)

    # small config consistent with the module:
    #   starting_res=4, stride=2, 3 upsample steps -> image_size=32
    gen = PallasGenerator(pkey,
                          latent_dim=32,
                          output_channels=3,
                          image_size=32,
                          hidden_layers=(32, 16, 8),
                          starting_res=4,
                          stride=2)

    z = jax.random.normal(zkey, (2, 32), jnp.float32)
    out = gen(z)
    out = jax.block_until_ready(out)

    assert out.shape == (2, 3, 32, 32), out.shape
    assert bool(jnp.all(jnp.isfinite(out)))

    # numerical check against a pure-XLA f32 reference of the same forward
    ref = jax.block_until_ready(gen._reference(z))
    max_err = float(jnp.max(jnp.abs(out - ref)))
    assert bool(jnp.allclose(out, ref, atol=3e-2, rtol=3e-2)), max_err

    print("KERNEL_OK")
</pallas_src>

<mosaic_0001>
module attributes {stable_mosaic.version = 11 : i64} {
  func.func @_generator_kernel(%arg0: i32, %arg1: memref<2x32xf32, #tpu.memory_space<vmem>>, %arg2: memref<32x512xbf16, #tpu.memory_space<vmem>>, %arg3: memref<1x512xf32, #tpu.memory_space<vmem>>, %arg4: memref<3x8x8xbf16, #tpu.memory_space<vmem>>, %arg5: memref<128x384xbf16, #tpu.memory_space<vmem>>, %arg6: memref<1x128xf32, #tpu.memory_space<vmem>>, %arg7: memref<3x16x8xbf16, #tpu.memory_space<vmem>>, %arg8: memref<128x384xbf16, #tpu.memory_space<vmem>>, %arg9: memref<1x128xf32, #tpu.memory_space<vmem>>, %arg10: memref<3x32x16xbf16, #tpu.memory_space<vmem>>, %arg11: memref<128x384xbf16, #tpu.memory_space<vmem>>, %arg12: memref<1x128xf32, #tpu.memory_space<vmem>>, %arg13: memref<32x128xf32, #tpu.memory_space<vmem>>) attributes {dimension_semantics = [#tpu.dimension_semantics<parallel>], iteration_bounds = array<i64: 2>, scalar_prefetch = 0 : i64, scratch_operands = 0 : i64, tpu.core_type = #tpu.core_type<tc>, window_params = [{pipeline_mode = #tpu.pipeline_mode<synchronous>, transform_indices = @transform_0, window_bounds = array<i64: 2, 32>}, {pipeline_mode = #tpu.pipeline_mode<synchronous>, transform_indices = @transform_1, window_bounds = array<i64: 32, 512>}, {pipeline_mode = #tpu.pipeline_mode<synchronous>, transform_indices = @transform_2, window_bounds = array<i64: 1, 512>}, {pipeline_mode = #tpu.pipeline_mode<synchronous>, transform_indices = @transform_3, window_bounds = array<i64: 3, 8, 8>}, {pipeline_mode = #tpu.pipeline_mode<synchronous>, transform_indices = @transform_4, window_bounds = array<i64: 128, 384>}, {pipeline_mode = #tpu.pipeline_mode<synchronous>, transform_indices = @transform_5, window_bounds = array<i64: 1, 128>}, {pipeline_mode = #tpu.pipeline_mode<synchronous>, transform_indices = @transform_6, window_bounds = array<i64: 3, 16, 8>}, {pipeline_mode = #tpu.pipeline_mode<synchronous>, transform_indices = @transform_7, window_bounds = array<i64: 128, 384>}, {pipeline_mode = #tpu.pipeline_mode<synchronous>, transform_indices = @transform_8, window_bounds = array<i64: 1, 128>}, {pipeline_mode = #tpu.pipeline_mode<synchronous>, transform_indices = @transform_9, window_bounds = array<i64: 3, 32, 16>}, {pipeline_mode = #tpu.pipeline_mode<synchronous>, transform_indices = @transform_10, window_bounds = array<i64: 128, 384>}, {pipeline_mode = #tpu.pipeline_mode<synchronous>, transform_indices = @transform_11, window_bounds = array<i64: 1, 128>}, {transform_indices = @transform_12, window_bounds = array<i64: 32, 128>}]} {
    %0 = arith.index_cast %arg0 : i32 to index
    %c0 = arith.constant 0 : index
    %1 = vector.load %arg1[%0, %c0] : memref<2x32xf32, #tpu.memory_space<vmem>>, vector<1x32xf32>
    %2 = arith.truncf %1 : vector<1x32xf32> to vector<1x32xbf16>
    %c0_0 = arith.constant 0 : index
    %c0_1 = arith.constant 0 : index
    %3 = vector.load %arg2[%c0_0, %c0_1] : memref<32x512xbf16, #tpu.memory_space<vmem>>, vector<32x512xbf16>
    %cst = arith.constant dense<0.000000e+00> : vector<1x512xf32>
    %4 = tpu.matmul %2, %3, %cst {dimension_numbers = #tpu.dot_dimension_numbers<[1], [0], [0], [1], [0, 0, 1, 1], [], []>} : vector<1x32xbf16>, vector<32x512xbf16>, vector<1x512xf32> -> vector<1x512xf32>
    %c0_2 = arith.constant 0 : index
    %c0_3 = arith.constant 0 : index
    %5 = vector.load %arg3[%c0_2, %c0_3] : memref<1x512xf32, #tpu.memory_space<vmem>>, vector<1x512xf32>
    %6 = arith.addf %4, %5 : vector<1x512xf32>
    %7 = tpu.iota {dimensions = array<i32: 0>} : vector<8x1xi32>
    %cst_4 = arith.constant 0.000000e+00 : f32
    %8 = vector.broadcast %cst_4 : f32 to vector<8x128xf32>
    %c0_i32 = arith.constant 0 : i32
    %9 = vector.broadcast %c0_i32 : i32 to vector<8x1xi32>
    %10 = arith.cmpi eq, %7, %9 : vector<8x1xi32>
    %11 = arith.extui %10 : vector<8x1xi1> to vector<8x1xi32>
    %12 = arith.sitofp %11 : vector<8x1xi32> to vector<8x1xf32>
    %13 = vector.extract_strided_slice %6 {offsets = [0, 0], sizes = [1, 128], strides = [1, 1]} : vector<1x512xf32> to vector<1x128xf32>
    %14 = vector.broadcast %12 : vector<8x1xf32> to vector<8x128xf32>
    %15 = vector.broadcast %13 : vector<1x128xf32> to vector<8x128xf32>
    %16 = arith.mulf %14, %15 : vector<8x128xf32>
    %17 = arith.addf %8, %16 : vector<8x128xf32>
    %c1_i32 = arith.constant 1 : i32
    %18 = vector.broadcast %c1_i32 : i32 to vector<8x1xi32>
    %19 = arith.cmpi eq, %7, %18 : vector<8x1xi32>
    %20 = arith.extui %19 : vector<8x1xi1> to vector<8x1xi32>
    %21 = arith.sitofp %20 : vector<8x1xi32> to vector<8x1xf32>
    %22 = vector.extract_strided_slice %6 {offsets = [0, 128], sizes = [1, 128], strides = [1, 1]} : vector<1x512xf32> to vector<1x128xf32>
    %23 = vector.broadcast %21 : vector<8x1xf32> to vector<8x128xf32>
    %24 = vector.broadcast %22 : vector<1x128xf32> to vector<8x128xf32>
    %25 = arith.mulf %23, %24 : vector<8x128xf32>
    %26 = arith.addf %17, %25 : vector<8x128xf32>
    %c2_i32 = arith.constant 2 : i32
    %27 = vector.broadcast %c2_i32 : i32 to vector<8x1xi32>
    %28 = arith.cmpi eq, %7, %27 : vector<8x1xi32>
    %29 = arith.extui %28 : vector<8x1xi1> to vector<8x1xi32>
    %30 = arith.sitofp %29 : vector<8x1xi32> to vector<8x1xf32>
    %31 = vector.extract_strided_slice %6 {offsets = [0, 256], sizes = [1, 128], strides = [1, 1]} : vector<1x512xf32> to vector<1x128xf32>
    %32 = vector.broadcast %30 : vector<8x1xf32> to vector<8x128xf32>
    %33 = vector.broadcast %31 : vector<1x128xf32> to vector<8x128xf32>
    %34 = arith.mulf %32, %33 : vector<8x128xf32>
    %35 = arith.addf %26, %34 : vector<8x128xf32>
    %c3_i32 = arith.constant 3 : i32
    %36 = vector.broadcast %c3_i32 : i32 to vector<8x1xi32>
    %37 = arith.cmpi eq, %7, %36 : vector<8x1xi32>
    %38 = arith.extui %37 : vector<8x1xi1> to vector<8x1xi32>
    %39 = arith.sitofp %38 : vector<8x1xi32> to vector<8x1xf32>
    %40 = vector.extract_strided_slice %6 {offsets = [0, 384], sizes = [1, 128], strides = [1, 1]} : vector<1x512xf32> to vector<1x128xf32>
    %41 = vector.broadcast %39 : vector<8x1xf32> to vector<8x128xf32>
    %42 = vector.broadcast %40 : vector<1x128xf32> to vector<8x128xf32>
    %43 = arith.mulf %41, %42 : vector<8x128xf32>
    %44 = arith.addf %35, %43 : vector<8x128xf32>
    %45 = arith.truncf %44 : vector<8x128xf32> to vector<8x128xbf16>
    %c0_5 = arith.constant 0 : index
    %c0_6 = arith.constant 0 : index
    %46 = vector.load %arg5[%c0_5, %c0_6] : memref<128x384xbf16, #tpu.memory_space<vmem>>, vector<128x384xbf16>
    %cst_7 = arith.constant dense<0.000000e+00> : vector<8x384xf32>
    %47 = tpu.matmul %45, %46, %cst_7 {dimension_numbers = #tpu.dot_dimension_numbers<[1], [0], [0], [1], [0, 0, 1, 1], [], []>} : vector<8x128xbf16>, vector<128x384xbf16>, vector<8x384xf32> -> vector<8x384xf32>
    %48 = arith.truncf %47 : vector<8x384xf32> to vector<8x384xbf16>
    %c0_8 = arith.constant 0 : index
    %c0_9 = arith.constant 0 : index
    %c0_10 = arith.constant 0 : index
    %49 = vector.load %arg4[%c0_8, %c0_9, %c0_10] : memref<3x8x8xbf16, #tpu.memory_space<vmem>>, vector<1x8x8xbf16>
    %50 = vector.shape_cast %49 : vector<1x8x8xbf16> to vector<8x8xbf16>
    %51 = vector.extract_strided_slice %48 {offsets = [0, 0], sizes = [8, 128], strides = [1, 1]} : vector<8x384xbf16> to vector<8x128xbf16>
    %cst_11 = arith.constant dense<0.000000e+00> : vector<8x128xf32>
    %52 = tpu.matmul %50, %51, %cst_11 {dimension_numbers = #tpu.dot_dimension_numbers<[1], [0], [0], [1], [0, 0, 1, 1], [], []>} : vector<8x8xbf16>, vector<8x128xbf16>, vector<8x128xf32> -> vector<8x128xf32>
    %c1 = arith.constant 1 : index
    %c0_12 = arith.constant 0 : index
    %c0_13 = arith.constant 0 : index
    %53 = vector.load %arg4[%c1, %c0_12, %c0_13] : memref<3x8x8xbf16, #tpu.memory_space<vmem>>, vector<1x8x8xbf16>
    %54 = vector.shape_cast %53 : vector<1x8x8xbf16> to vector<8x8xbf16>
    %55 = vector.extract_strided_slice %48 {offsets = [0, 128], sizes = [8, 128], strides = [1, 1]} : vector<8x384xbf16> to vector<8x128xbf16>
    %cst_14 = arith.constant dense<0.000000e+00> : vector<8x128xf32>
    %56 = tpu.matmul %54, %55, %cst_14 {dimension_numbers = #tpu.dot_dimension_numbers<[1], [0], [0], [1], [0, 0, 1, 1], [], []>} : vector<8x8xbf16>, vector<8x128xbf16>, vector<8x128xf32> -> vector<8x128xf32>
    %57 = arith.addf %52, %56 : vector<8x128xf32>
    %c2 = arith.constant 2 : index
    %c0_15 = arith.constant 0 : index
    %c0_16 = arith.constant 0 : index
    %58 = vector.load %arg4[%c2, %c0_15, %c0_16] : memref<3x8x8xbf16, #tpu.memory_space<vmem>>, vector<1x8x8xbf16>
    %59 = vector.shape_cast %58 : vector<1x8x8xbf16> to vector<8x8xbf16>
    %60 = vector.extract_strided_slice %48 {offsets = [0, 256], sizes = [8, 128], strides = [1, 1]} : vector<8x384xbf16> to vector<8x128xbf16>
    %cst_17 = arith.constant dense<0.000000e+00> : vector<8x128xf32>
    %61 = tpu.matmul %59, %60, %cst_17 {dimension_numbers = #tpu.dot_dimension_numbers<[1], [0], [0], [1], [0, 0, 1, 1], [], []>} : vector<8x8xbf16>, vector<8x128xbf16>, vector<8x128xf32> -> vector<8x128xf32>
    %62 = arith.addf %57, %61 : vector<8x128xf32>
    %c0_18 = arith.constant 0 : index
    %c0_19 = arith.constant 0 : index
    %63 = vector.load %arg6[%c0_18, %c0_19] : memref<1x128xf32, #tpu.memory_space<vmem>>, vector<1x128xf32>
    %64 = vector.broadcast %63 : vector<1x128xf32> to vector<8x128xf32>
    %65 = arith.addf %62, %64 : vector<8x128xf32>
    %cst_20 = arith.constant 0.000000e+00 : f32
    %66 = vector.broadcast %cst_20 : f32 to vector<8x128xf32>
    %67 = arith.maximumf %65, %66 : vector<8x128xf32>
    %68 = arith.truncf %67 : vector<8x128xf32> to vector<8x128xbf16>
    %c0_21 = arith.constant 0 : index
    %c0_22 = arith.constant 0 : index
    %69 = vector.load %arg8[%c0_21, %c0_22] : memref<128x384xbf16, #tpu.memory_space<vmem>>, vector<128x384xbf16>
    %cst_23 = arith.constant dense<0.000000e+00> : vector<8x384xf32>
    %70 = tpu.matmul %68, %69, %cst_23 {dimension_numbers = #tpu.dot_dimension_numbers<[1], [0], [0], [1], [0, 0, 1, 1], [], []>} : vector<8x128xbf16>, vector<128x384xbf16>, vector<8x384xf32> -> vector<8x384xf32>
    %71 = arith.truncf %70 : vector<8x384xf32> to vector<8x384xbf16>
    %c0_24 = arith.constant 0 : index
    %c0_25 = arith.constant 0 : index
    %c0_26 = arith.constant 0 : index
    %72 = vector.load %arg7[%c0_24, %c0_25, %c0_26] : memref<3x16x8xbf16, #tpu.memory_space<vmem>>, vector<1x16x8xbf16>
    %73 = vector.shape_cast %72 : vector<1x16x8xbf16> to vector<16x8xbf16>
    %74 = vector.extract_strided_slice %71 {offsets = [0, 0], sizes = [8, 128], strides = [1, 1]} : vector<8x384xbf16> to vector<8x128xbf16>
    %cst_27 = arith.constant dense<0.000000e+00> : vector<16x128xf32>
    %75 = tpu.matmul %73, %74, %cst_27 {dimension_numbers = #tpu.dot_dimension_numbers<[1], [0], [0], [1], [0, 0, 1, 1], [], []>} : vector<16x8xbf16>, vector<8x128xbf16>, vector<16x128xf32> -> vector<16x128xf32>
    %c1_28 = arith.constant 1 : index
    %c0_29 = arith.constant 0 : index
    %c0_30 = arith.constant 0 : index
    %76 = vector.load %arg7[%c1_28, %c0_29, %c0_30] : memref<3x16x8xbf16, #tpu.memory_space<vmem>>, vector<1x16x8xbf16>
    %77 = vector.shape_cast %76 : vector<1x16x8xbf16> to vector<16x8xbf16>
    %78 = vector.extract_strided_slice %71 {offsets = [0, 128], sizes = [8, 128], strides = [1, 1]} : vector<8x384xbf16> to vector<8x128xbf16>
    %cst_31 = arith.constant dense<0.000000e+00> : vector<16x128xf32>
    %79 = tpu.matmul %77, %78, %cst_31 {dimension_numbers = #tpu.dot_dimension_numbers<[1], [0], [0], [1], [0, 0, 1, 1], [], []>} : vector<16x8xbf16>, vector<8x128xbf16>, vector<16x128xf32> -> vector<16x128xf32>
    %80 = arith.addf %75, %79 : vector<16x128xf32>
    %c2_32 = arith.constant 2 : index
    %c0_33 = arith.constant 0 : index
    %c0_34 = arith.constant 0 : index
    %81 = vector.load %arg7[%c2_32, %c0_33, %c0_34] : memref<3x16x8xbf16, #tpu.memory_space<vmem>>, vector<1x16x8xbf16>
    %82 = vector.shape_cast %81 : vector<1x16x8xbf16> to vector<16x8xbf16>
    %83 = vector.extract_strided_slice %71 {offsets = [0, 256], sizes = [8, 128], strides = [1, 1]} : vector<8x384xbf16> to vector<8x128xbf16>
    %cst_35 = arith.constant dense<0.000000e+00> : vector<16x128xf32>
    %84 = tpu.matmul %82, %83, %cst_35 {dimension_numbers = #tpu.dot_dimension_numbers<[1], [0], [0], [1], [0, 0, 1, 1], [], []>} : vector<16x8xbf16>, vector<8x128xbf16>, vector<16x128xf32> -> vector<16x128xf32>
    %85 = arith.addf %80, %84 : vector<16x128xf32>
    %c0_36 = arith.constant 0 : index
    %c0_37 = arith.constant 0 : index
    %86 = vector.load %arg9[%c0_36, %c0_37] : memref<1x128xf32, #tpu.memory_space<vmem>>, vector<1x128xf32>
    %87 = vector.broadcast %86 : vector<1x128xf32> to vector<16x128xf32>
    %88 = arith.addf %85, %87 : vector<16x128xf32>
    %cst_38 = arith.constant 0.000000e+00 : f32
    %89 = vector.broadcast %cst_38 : f32 to vector<16x128xf32>
    %90 = arith.maximumf %88, %89 : vector<16x128xf32>
    %91 = arith.truncf %90 : vector<16x128xf32> to vector<16x128xbf16>
    %c0_39 = arith.constant 0 : index
    %c0_40 = arith.constant 0 : index
    %92 = vector.load %arg11[%c0_39, %c0_40] : memref<128x384xbf16, #tpu.memory_space<vmem>>, vector<128x384xbf16>
    %cst_41 = arith.constant dense<0.000000e+00> : vector<16x384xf32>
    %93 = tpu.matmul %91, %92, %cst_41 {dimension_numbers = #tpu.dot_dimension_numbers<[1], [0], [0], [1], [0, 0, 1, 1], [], []>} : vector<16x128xbf16>, vector<128x384xbf16>, vector<16x384xf32> -> vector<16x384xf32>
    %94 = arith.truncf %93 : vector<16x384xf32> to vector<16x384xbf16>
    %c0_42 = arith.constant 0 : index
    %c0_43 = arith.constant 0 : index
    %c0_44 = arith.constant 0 : index
    %95 = vector.load %arg10[%c0_42, %c0_43, %c0_44] : memref<3x32x16xbf16, #tpu.memory_space<vmem>>, vector<1x32x16xbf16>
    %96 = vector.shape_cast %95 : vector<1x32x16xbf16> to vector<32x16xbf16>
    %97 = vector.extract_strided_slice %94 {offsets = [0, 0], sizes = [16, 128], strides = [1, 1]} : vector<16x384xbf16> to vector<16x128xbf16>
    %cst_45 = arith.constant dense<0.000000e+00> : vector<32x128xf32>
    %98 = tpu.matmul %96, %97, %cst_45 {dimension_numbers = #tpu.dot_dimension_numbers<[1], [0], [0], [1], [0, 0, 1, 1], [], []>} : vector<32x16xbf16>, vector<16x128xbf16>, vector<32x128xf32> -> vector<32x128xf32>
    %c1_46 = arith.constant 1 : index
    %c0_47 = arith.constant 0 : index
    %c0_48 = arith.constant 0 : index
    %99 = vector.load %arg10[%c1_46, %c0_47, %c0_48] : memref<3x32x16xbf16, #tpu.memory_space<vmem>>, vector<1x32x16xbf16>
    %100 = vector.shape_cast %99 : vector<1x32x16xbf16> to vector<32x16xbf16>
    %101 = vector.extract_strided_slice %94 {offsets = [0, 128], sizes = [16, 128], strides = [1, 1]} : vector<16x384xbf16> to vector<16x128xbf16>
    %cst_49 = arith.constant dense<0.000000e+00> : vector<32x128xf32>
    %102 = tpu.matmul %100, %101, %cst_49 {dimension_numbers = #tpu.dot_dimension_numbers<[1], [0], [0], [1], [0, 0, 1, 1], [], []>} : vector<32x16xbf16>, vector<16x128xbf16>, vector<32x128xf32> -> vector<32x128xf32>
    %103 = arith.addf %98, %102 : vector<32x128xf32>
    %c2_50 = arith.constant 2 : index
    %c0_51 = arith.constant 0 : index
    %c0_52 = arith.constant 0 : index
    %104 = vector.load %arg10[%c2_50, %c0_51, %c0_52] : memref<3x32x16xbf16, #tpu.memory_space<vmem>>, vector<1x32x16xbf16>
    %105 = vector.shape_cast %104 : vector<1x32x16xbf16> to vector<32x16xbf16>
    %106 = vector.extract_strided_slice %94 {offsets = [0, 256], sizes = [16, 128], strides = [1, 1]} : vector<16x384xbf16> to vector<16x128xbf16>
    %cst_53 = arith.constant dense<0.000000e+00> : vector<32x128xf32>
    %107 = tpu.matmul %105, %106, %cst_53 {dimension_numbers = #tpu.dot_dimension_numbers<[1], [0], [0], [1], [0, 0, 1, 1], [], []>} : vector<32x16xbf16>, vector<16x128xbf16>, vector<32x128xf32> -> vector<32x128xf32>
    %108 = arith.addf %103, %107 : vector<32x128xf32>
    %c0_54 = arith.constant 0 : index
    %c0_55 = arith.constant 0 : index
    %109 = vector.load %arg12[%c0_54, %c0_55] : memref<1x128xf32, #tpu.memory_space<vmem>>, vector<1x128xf32>
    %110 = vector.broadcast %109 : vector<1x128xf32> to vector<32x128xf32>
    %111 = arith.addf %108, %110 : vector<32x128xf32>
    %112 = math.tanh %111 : vector<32x128xf32>
    %c0_56 = arith.constant 0 : index
    %c0_57 = arith.constant 0 : index
    %113 = vector.load %arg13[%c0_56, %c0_57] : memref<32x128xf32, #tpu.memory_space<vmem>>, vector<32x128xf32>
    tpu.vector_store %arg13[%c0_56, %c0_57], %112 {strides = array<i32>} : memref<32x128xf32, #tpu.memory_space<vmem>>, vector<32x128xf32>,
    return
  }
  func.func @transform_0(%arg0: i32) -> (i32, i32) {
    %c0_i32 = arith.constant 0 : i32
    %c0_i32_0 = arith.constant 0 : i32
    %c0_i32_1 = arith.constant 0 : i32
    return %c0_i32, %c0_i32_0 : i32, i32
  }
  func.func @transform_1(%arg0: i32) -> (i32, i32) {
    %c0_i32 = arith.constant 0 : i32
    %c0_i32_0 = arith.constant 0 : i32
    %c0_i32_1 = arith.constant 0 : i32
    return %c0_i32, %c0_i32_0 : i32, i32
  }
  func.func @transform_2(%arg0: i32) -> (i32, i32) {
    %c0_i32 = arith.constant 0 : i32
    %c0_i32_0 = arith.constant 0 : i32
    %c0_i32_1 = arith.constant 0 : i32
    return %c0_i32, %c0_i32_0 : i32, i32
  }
  func.func @transform_3(%arg0: i32) -> (i32, i32, i32) {
    %c0_i32 = arith.constant 0 : i32
    %c0_i32_0 = arith.constant 0 : i32
    %c0_i32_1 = arith.constant 0 : i32
    %c0_i32_2 = arith.constant 0 : i32
    return %c0_i32, %c0_i32_0, %c0_i32_1 : i32, i32, i32
  }
  func.func @transform_4(%arg0: i32) -> (i32, i32) {
    %c0_i32 = arith.constant 0 : i32
    %c0_i32_0 = arith.constant 0 : i32
    %c0_i32_1 = arith.constant 0 : i32
    return %c0_i32, %c0_i32_0 : i32, i32
  }
  func.func @transform_5(%arg0: i32) -> (i32, i32) {
    %c0_i32 = arith.constant 0 : i32
    %c0_i32_0 = arith.constant 0 : i32
    %c0_i32_1 = arith.constant 0 : i32
    return %c0_i32, %c0_i32_0 : i32, i32
  }
  func.func @transform_6(%arg0: i32) -> (i32, i32, i32) {
    %c0_i32 = arith.constant 0 : i32
    %c0_i32_0 = arith.constant 0 : i32
    %c0_i32_1 = arith.constant 0 : i32
    %c0_i32_2 = arith.constant 0 : i32
    return %c0_i32, %c0_i32_0, %c0_i32_1 : i32, i32, i32
  }
  func.func @transform_7(%arg0: i32) -> (i32, i32) {
    %c0_i32 = arith.constant 0 : i32
    %c0_i32_0 = arith.constant 0 : i32
    %c0_i32_1 = arith.constant 0 : i32
    return %c0_i32, %c0_i32_0 : i32, i32
  }
  func.func @transform_8(%arg0: i32) -> (i32, i32) {
    %c0_i32 = arith.constant 0 : i32
    %c0_i32_0 = arith.constant 0 : i32
    %c0_i32_1 = arith.constant 0 : i32
    return %c0_i32, %c0_i32_0 : i32, i32
  }
  func.func @transform_9(%arg0: i32) -> (i32, i32, i32) {
    %c0_i32 = arith.constant 0 : i32
    %c0_i32_0 = arith.constant 0 : i32
    %c0_i32_1 = arith.constant 0 : i32
    %c0_i32_2 = arith.constant 0 : i32
    return %c0_i32, %c0_i32_0, %c0_i32_1 : i32, i32, i32
  }
  func.func @transform_10(%arg0: i32) -> (i32, i32) {
    %c0_i32 = arith.constant 0 : i32
    %c0_i32_0 = arith.constant 0 : i32
    %c0_i32_1 = arith.constant 0 : i32
    return %c0_i32, %c0_i32_0 : i32, i32
  }
  func.func @transform_11(%arg0: i32) -> (i32, i32) {
    %c0_i32 = arith.constant 0 : i32
    %c0_i32_0 = arith.constant 0 : i32
    %c0_i32_1 = arith.constant 0 : i32
    return %c0_i32, %c0_i32_0 : i32, i32
  }
  func.func @transform_12(%arg0: i32) -> (i32, i32) {
    %c0_i32 = arith.constant 0 : i32
    %c0_i32_0 = arith.constant 0 : i32
    return %arg0, %c0_i32 : i32, i32
  }
}

</mosaic_0001>

<llo_original>
// kernel: _forward.1
$region0: #{_forward.1}
  #allocation0 [shape = 'u32[]', space=smem, size = 0x4, offset = 0x4, fixed_abs, tag = 'smem constant byte address 0x4 - core index']
  #allocation1 [shape = 'u32[144,128]{1,0:T(1,128)}', space=vmem, size = 0x12000, scoped, tag = 'internal scratch']
  %s0 = inlined_call_operand.hbm [shape: f32[2,32], index: 0, kind: input, shape index: {}]
  %s1 = inlined_call_operand.hbm [shape: bf16[32,512], index: 1, kind: input, shape index: {}]
  %s2 = inlined_call_operand.hbm [shape: f32[1,512], index: 2, kind: input, shape index: {}]
  %s3 = inlined_call_operand.hbm [shape: bf16[3,8,8], index: 3, kind: input, shape index: {}]
  %s4 = inlined_call_operand.hbm [shape: bf16[128,384], index: 4, kind: input, shape index: {}]
  %s5 = inlined_call_operand.vmem [shape: f32[1,128], index: 5, kind: input, shape index: {}]
  %s6 = inlined_call_operand.hbm [shape: bf16[3,16,8], index: 6, kind: input, shape index: {}]
  %s7 = inlined_call_operand.hbm [shape: bf16[128,384], index: 7, kind: input, shape index: {}]
  %s8 = inlined_call_operand.vmem [shape: f32[1,128], index: 8, kind: input, shape index: {}]
  %s9 = inlined_call_operand.hbm [shape: bf16[3,32,16], index: 9, kind: input, shape index: {}]
  %s10 = inlined_call_operand.hbm [shape: bf16[128,384], index: 10, kind: input, shape index: {}]
  %s11 = inlined_call_operand.vmem [shape: f32[1,128], index: 11, kind: input, shape index: {}]
  %s12 = inlined_call_operand.vmem [shape: f32[64,128], index: 12, kind: output, shape index: {}]
  %s13 = sld [smem:[#allocation0]]
  $region117: #{_forward.1} parent=0
    _
  %s15 = ssub.s32 1, %s13
  %s16 = scalar_select 0, %s15, %s13
  $region1: #{_forward.1} parent=0
    #allocation2 [shape = 'u8[1024]{0}', space=vmem, size = 0x400, scoped, tag = 'input window, operand 0, single buffered']
    #allocation3 [shape = 's32[2]{0}', space=sflag, size = 0x8, scoped, tag = 'scoped memory for _forward.1']
    #allocation4 [shape = 'u8[32768]{0}', space=vmem, size = 0x8000, scoped, tag = 'input window, operand 1, single buffered']
    #allocation5 [shape = 's32[1]{0}', space=sflag, size = 0x4, scoped, tag = 'scoped memory for _forward.1']
    #allocation6 [shape = 'u8[2048]{0}', space=vmem, size = 0x800, scoped, tag = 'input window, operand 2, single buffered']
    #allocation7 [shape = 'u8[6144]{0}', space=vmem, size = 0x1800, scoped, tag = 'input window, operand 3, single buffered']
    #allocation8 [shape = 's32[1]{0}', space=sflag, size = 0x4, scoped, tag = 'scoped memory for _forward.1']
    #allocation9 [shape = 'u8[98304]{0}', space=vmem, size = 0x18000, scoped, tag = 'input window, operand 4, single buffered']
    #allocation10 [shape = 'u8[12288]{0}', space=vmem, size = 0x3000, scoped, tag = 'input window, operand 6, single buffered']
    #allocation11 [shape = 's32[1]{0}', space=sflag, size = 0x4, scoped, tag = 'scoped memory for _forward.1']
    #allocation12 [shape = 'u8[98304]{0}', space=vmem, size = 0x18000, scoped, tag = 'input window, operand 7, single buffered']
    #allocation13 [shape = 'u8[24576]{0}', space=vmem, size = 0x6000, scoped, tag = 'input window, operand 9, single buffered']
    #allocation14 [shape = 's32[1]{0}', space=sflag, size = 0x4, scoped, tag = 'scoped memory for _forward.1']
    #allocation15 [shape = 'u8[98304]{0}', space=vmem, size = 0x18000, scoped, tag = 'input window, operand 10, single buffered']
    %17 = vsyncpa [#allocation3], 0
    %18 = vsyncpa [#allocation5], 0
    %19 = vsyncpa [#allocation8], 0
    %20 = vsyncpa [#allocation11], 0
    %21 = vsyncpa [#allocation14], 0
    loop: start=0, step=1, limit=4
    $region2: #{_forward.1} parent=1 // loop_pre_header
      _
    $region3: #{_forward.1} parent=1 // loop_header
      %s23 = sphi 0, %s27
      %p24 = scmp.ge.s32.totalorder %s23, 4
      %s31 = sphi 0, %s31
      %s33 = sphi 0, %s31
      %s34 = sphi 0, %s33
      %s48 = sphi 0, %s34
      %s52 = sphi 0, %s52
      %s54 = sphi 0, %s52
      %s55 = sphi 0, %s54
      %s69 = sphi 0, %s55
      %s73 = sphi 0, %s73
      %s75 = sphi 0, %s73
      %s76 = sphi 0, %s75
      %s90 = sphi 0, %s76
      %s94 = sphi 0, %s94
      %s96 = sphi 0, %s94
      %s97 = sphi 0, %s96
      %s111 = sphi 0, %s97
      %s115 = sphi 0, %s115
      %s117 = sphi 0, %s115
      %s118 = sphi 0, %s117
      %s132 = sphi 0, %s118
      %s136 = sphi 0, %s136
      %s138 = sphi 0, %s136
      %s139 = sphi 0, %s138
      %s153 = sphi 0, %s139
      %s157 = sphi 0, %s157
      %s159 = sphi 0, %s157
      %s160 = sphi 0, %s159
      %s174 = sphi 0, %s160
      %s178 = sphi 0, %s178
      %s180 = sphi 0, %s178
      %s181 = sphi 0, %s180
      %s195 = sphi 0, %s181
      %s199 = sphi 0, %s199
      %s201 = sphi 0, %s199
      %s202 = sphi 0, %s201
      %s216 = sphi 0, %s202
      %s220 = sphi 0, %s220
      %s222 = sphi 0, %s220
      %s223 = sphi 0, %s222
      %s237 = sphi 0, %s223
      %s241 = sphi 0, %s241
      %s243 = sphi 0, %s241
      %s244 = sphi 0, %s243
      %s258 = sphi 0, %s244
      %s262 = sphi 0, %s262
      %s264 = sphi 0, %s262
      %s265 = sphi 0, %s264
      %s279 = sphi 0, %s265
      %s285 = sphi 0, %s287
      %s288 = sphi 0, %s285
      %s289 = sphi 0, %s288
      %s305 = sphi 0, %s289
    $region4: #{_forward.1} parent=1 // loop_header_branch
      %26 = sbr.rel (%p24) target = $region8
    $region5: #{_forward.1} parent=1 // loop_body
      %s28 = ssub.s32 %s23, 1
      %s29 = ssub.s32 %s23, 2
      %s30 = sadd.s32 %s23, 1
      %s32 = sadd.s32 %s31, 1
      %p35 = scmp.eq.s32.totalorder %s23, 1
      %p36 = scmp.ne.s32.totalorder %s31, %s33
      %p37 = scmp.eq.s32.totalorder %s23, 0
      %p38 = por %p36, %p37
      %p39 = scmp.ne.s32.totalorder %s31, %s33
      %p40 = scmp.eq.s32.totalorder %s28, 1
      %p41 = por %p39, %p40
      %p42 = scmp.ne.s32.totalorder %s33, %s34
      %p43 = scmp.eq.s32.totalorder %s28, 0
      %p44 = por %p42, %p43
      %p45 = scmp.ne.s32.totalorder %s33, %s34
      %p46 = scmp.eq.s32.totalorder %s29, 1
      %p47 = por %p45, %p46
      %p49 = scmp.ne.s32.totalorder %s34, %s48
      %p50 = scmp.eq.s32.totalorder %s29, 0
      %p51 = por %p49, %p50
      %s53 = sadd.s32 %s52, 1
      %p56 = scmp.eq.s32.totalorder %s23, 1
      %p57 = scmp.ne.s32.totalorder %s52, %s54
      %p58 = scmp.eq.s32.totalorder %s23, 0
      %p59 = por %p57, %p58
      %p60 = scmp.ne.s32.totalorder %s52, %s54
      %p61 = scmp.eq.s32.totalorder %s28, 1
      %p62 = por %p60, %p61
      %p63 = scmp.ne.s32.totalorder %s54, %s55
      %p64 = scmp.eq.s32.totalorder %s28, 0
      %p65 = por %p63, %p64
      %p66 = scmp.ne.s32.totalorder %s54, %s55
      %p67 = scmp.eq.s32.totalorder %s29, 1
      %p68 = por %p66, %p67
      %p70 = scmp.ne.s32.totalorder %s55, %s69
      %p71 = scmp.eq.s32.totalorder %s29, 0
      %p72 = por %p70, %p71
      %s74 = sadd.s32 %s73, 1
      %p77 = scmp.eq.s32.totalorder %s23, 1
      %p78 = scmp.ne.s32.totalorder %s73, %s75
      %p79 = scmp.eq.s32.totalorder %s23, 0
      %p80 = por %p78, %p79
      %p81 = scmp.ne.s32.totalorder %s73, %s75
      %p82 = scmp.eq.s32.totalorder %s28, 1
      %p83 = por %p81, %p82
      %p84 = scmp.ne.s32.totalorder %s75, %s76
      %p85 = scmp.eq.s32.totalorder %s28, 0
      %p86 = por %p84, %p85
      %p87 = scmp.ne.s32.totalorder %s75, %s76
      %p88 = scmp.eq.s32.totalorder %s29, 1
      %p89 = por %p87, %p88
      %p91 = scmp.ne.s32.totalorder %s76, %s90
      %p92 = scmp.eq.s32.totalorder %s29, 0
      %p93 = por %p91, %p92
      %s95 = sadd.s32 %s94, 1
      %p98 = scmp.eq.s32.totalorder %s23, 1
      %p99 = scmp.ne.s32.totalorder %s94, %s96
      %p100 = scmp.eq.s32.totalorder %s23, 0
      %p101 = por %p99, %p100
      %p102 = scmp.ne.s32.totalorder %s94, %s96
      %p103 = scmp.eq.s32.totalorder %s28, 1
      %p104 = por %p102, %p103
      %p105 = scmp.ne.s32.totalorder %s96, %s97
      %p106 = scmp.eq.s32.totalorder %s28, 0
      %p107 = por %p105, %p106
      %p108 = scmp.ne.s32.totalorder %s96, %s97
      %p109 = scmp.eq.s32.totalorder %s29, 1
      %p110 = por %p108, %p109
      %p112 = scmp.ne.s32.totalorder %s97, %s111
      %p113 = scmp.eq.s32.totalorder %s29, 0
      %p114 = por %p112, %p113
      %s116 = sadd.s32 %s115, 1
      %p119 = scmp.eq.s32.totalorder %s23, 1
      %p120 = scmp.ne.s32.totalorder %s115, %s117
      %p121 = scmp.eq.s32.totalorder %s23, 0
      %p122 = por %p120, %p121
      %p123 = scmp.ne.s32.totalorder %s115, %s117
      %p124 = scmp.eq.s32.totalorder %s28, 1
      %p125 = por %p123, %p124
      %p126 = scmp.ne.s32.totalorder %s117, %s118
      %p127 = scmp.eq.s32.totalorder %s28, 0
      %p128 = por %p126, %p127
      %p129 = scmp.ne.s32.totalorder %s117, %s118
      %p130 = scmp.eq.s32.totalorder %s29, 1
      %p131 = por %p129, %p130
      %p133 = scmp.ne.s32.totalorder %s118, %s132
      %p134 = scmp.eq.s32.totalorder %s29, 0
      %p135 = por %p133, %p134
      %s137 = sadd.s32 %s136, 1
      %p140 = scmp.eq.s32.totalorder %s23, 1
      %p141 = scmp.ne.s32.totalorder %s136, %s138
      %p142 = scmp.eq.s32.totalorder %s23, 0
      %p143 = por %p141, %p142
      %p144 = scmp.ne.s32.totalorder %s136, %s138
      %p145 = scmp.eq.s32.totalorder %s28, 1
      %p146 = por %p144, %p145
      %p147 = scmp.ne.s32.totalorder %s138, %s139
      %p148 = scmp.eq.s32.totalorder %s28, 0
      %p149 = por %p147, %p148
      %p150 = scmp.ne.s32.totalorder %s138, %s139
      %p151 = scmp.eq.s32.totalorder %s29, 1
      %p152 = por %p150, %p151
      %p154 = scmp.ne.s32.totalorder %s139, %s153
      %p155 = scmp.eq.s32.totalorder %s29, 0
      %p156 = por %p154, %p155
      %s158 = sadd.s32 %s157, 1
      %p161 = scmp.eq.s32.totalorder %s23, 1
      %p162 = scmp.ne.s32.totalorder %s157, %s159
      %p163 = scmp.eq.s32.totalorder %s23, 0
      %p164 = por %p162, %p163
      %p165 = scmp.ne.s32.totalorder %s157, %s159
      %p166 = scmp.eq.s32.totalorder %s28, 1
      %p167 = por %p165, %p166
      %p168 = scmp.ne.s32.totalorder %s159, %s160
      %p169 = scmp.eq.s32.totalorder %s28, 0
      %p170 = por %p168, %p169
      %p171 = scmp.ne.s32.totalorder %s159, %s160
      %p172 = scmp.eq.s32.totalorder %s29, 1
      %p173 = por %p171, %p172
      %p175 = scmp.ne.s32.totalorder %s160, %s174
      %p176 = scmp.eq.s32.totalorder %s29, 0
      %p177 = por %p175, %p176
      %s179 = sadd.s32 %s178, 1
      %p182 = scmp.eq.s32.totalorder %s23, 1
      %p183 = scmp.ne.s32.totalorder %s178, %s180
      %p184 = scmp.eq.s32.totalorder %s23, 0
      %p185 = por %p183, %p184
      %p186 = scmp.ne.s32.totalorder %s178, %s180
      %p187 = scmp.eq.s32.totalorder %s28, 1
      %p188 = por %p186, %p187
      %p189 = scmp.ne.s32.totalorder %s180, %s181
      %p190 = scmp.eq.s32.totalorder %s28, 0
      %p191 = por %p189, %p190
      %p192 = scmp.ne.s32.totalorder %s180, %s181
      %p193 = scmp.eq.s32.totalorder %s29, 1
      %p194 = por %p192, %p193
      %p196 = scmp.ne.s32.totalorder %s181, %s195
      %p197 = scmp.eq.s32.totalorder %s29, 0
      %p198 = por %p196, %p197
      %s200 = sadd.s32 %s199, 1
      %p203 = scmp.eq.s32.totalorder %s23, 1
      %p204 = scmp.ne.s32.totalorder %s199, %s201
      %p205 = scmp.eq.s32.totalorder %s23, 0
      %p206 = por %p204, %p205
      %p207 = scmp.ne.s32.totalorder %s199, %s201
      %p208 = scmp.eq.s32.totalorder %s28, 1
      %p209 = por %p207, %p208
      %p210 = scmp.ne.s32.totalorder %s201, %s202
      %p211 = scmp.eq.s32.totalorder %s28, 0
      %p212 = por %p210, %p211
      %p213 = scmp.ne.s32.totalorder %s201, %s202
      %p214 = scmp.eq.s32.totalorder %s29, 1
      %p215 = por %p213, %p214
      %p217 = scmp.ne.s32.totalorder %s202, %s216
      %p218 = scmp.eq.s32.totalorder %s29, 0
      %p219 = por %p217, %p218
      %s221 = sadd.s32 %s220, 1
      %p224 = scmp.eq.s32.totalorder %s23, 1
      %p225 = scmp.ne.s32.totalorder %s220, %s222
      %p226 = scmp.eq.s32.totalorder %s23, 0
      %p227 = por %p225, %p226
      %p228 = scmp.ne.s32.totalorder %s220, %s222
      %p229 = scmp.eq.s32.totalorder %s28, 1
      %p230 = por %p228, %p229
      %p231 = scmp.ne.s32.totalorder %s222, %s223
      %p232 = scmp.eq.s32.totalorder %s28, 0
      %p233 = por %p231, %p232
      %p234 = scmp.ne.s32.totalorder %s222, %s223
      %p235 = scmp.eq.s32.totalorder %s29, 1
      %p236 = por %p234, %p235
      %p238 = scmp.ne.s32.totalorder %s223, %s237
      %p239 = scmp.eq.s32.totalorder %s29, 0
      %p240 = por %p238, %p239
      %s242 = sadd.s32 %s241, 1
      %p245 = scmp.eq.s32.totalorder %s23, 1
      %p246 = scmp.ne.s32.totalorder %s241, %s243
      %p247 = scmp.eq.s32.totalorder %s23, 0
      %p248 = por %p246, %p247
      %p249 = scmp.ne.s32.totalorder %s241, %s243
      %p250 = scmp.eq.s32.totalorder %s28, 1
      %p251 = por %p249, %p250
      %p252 = scmp.ne.s32.totalorder %s243, %s244
      %p253 = scmp.eq.s32.totalorder %s28, 0
      %p254 = por %p252, %p253
      %p255 = scmp.ne.s32.totalorder %s243, %s244
      %p256 = scmp.eq.s32.totalorder %s29, 1
      %p257 = por %p255, %p256
      %p259 = scmp.ne.s32.totalorder %s244, %s258
      %p260 = scmp.eq.s32.totalorder %s29, 0
      %p261 = por %p259, %p260
      %s263 = sadd.s32 %s262, 1
      %p266 = scmp.eq.s32.totalorder %s23, 1
      %p267 = scmp.ne.s32.totalorder %s262, %s264
      %p268 = scmp.eq.s32.totalorder %s23, 0
      %p269 = por %p267, %p268
      %p270 = scmp.ne.s32.totalorder %s262, %s264
      %p271 = scmp.eq.s32.totalorder %s28, 1
      %p272 = por %p270, %p271
      %p273 = scmp.ne.s32.totalorder %s264, %s265
      %p274 = scmp.eq.s32.totalorder %s28, 0
      %p275 = por %p273, %p274
      %p276 = scmp.ne.s32.totalorder %s264, %s265
      %p277 = scmp.eq.s32.totalorder %s29, 1
      %p278 = por %p276, %p277
      %p280 = scmp.ne.s32.totalorder %s265, %s279
      %p281 = scmp.eq.s32.totalorder %s29, 0
      %p282 = por %p280, %p281
      %s283 = ssub.s32 %s23, %s30
      %p284 = scmp.eq.s32.totalorder %s283, 0
      %s286 = sadd.s32 %s285, 1
      %s287 = scalar_select %p284, %s285, %s286
      %p290 = pneg %p284
      %p291 = scmp.eq.s32.totalorder %s23, 1
      %p292 = por %p290, %p291
      %p293 = scmp.ne.s32.totalorder %s285, %s288
      %p294 = scmp.eq.s32.totalorder %s23, 0
      %p295 = por %p293, %p294
      %p296 = scmp.ne.s32.totalorder %s285, %s288
      %p297 = scmp.eq.s32.totalorder %s28, 1
      %p298 = por %p296, %p297
      %p299 = scmp.ne.s32.totalorder %s288, %s289
      %p300 = scmp.eq.s32.totalorder %s28, 0
      %p301 = por %p299, %p300
      %p302 = scmp.ne.s32.totalorder %s288, %s289
      %p303 = scmp.eq.s32.totalorder %s29, 1
      %p304 = por %p302, %p303
      %p306 = scmp.ne.s32.totalorder %s289, %s305
      %p307 = scmp.eq.s32.totalorder %s29, 0
      %p308 = por %p306, %p307
      %p309 = scmp.le.s32.totalorder 1, %s23
      %p310 = scmp.lt.s32.totalorder %s23, 3
      %p311 = pnand %p309, %p310
      %p312 = pneg %p311
      // Predicated region
      $region9: #{_forward.1} parent=5 // pred_check
        _
      $region10: #{_forward.1} parent=5 // pred_check_branch
        %314 = sbr.rel (%p311) target = $region12
      $region11: #{_forward.1} parent=5 // pred_region
        %s315 = ssub.s32 %s23, 1
        // Predicated region
        $region13: #{_forward.1} parent=11 // pred_check
          %p316 = pneg %p44
        $region14: #{_forward.1} parent=11 // pred_check_branch
          %318 = sbr.rel (%p316) target = $region16
        $region15: #{_forward.1} parent=11 // pred_region
          %s320 = ssub.s32 32, 32
          %321 = vsyncadd [#allocation3], %s320
          %s323 = sshll.u32 [#allocation2], 4
          %s324 = int_to_ptr.vmem [resolvable:$true] %s323
          %326 = dma.hbm_to_vmem [thread:$0]  %s0, 32, %s324, [#allocation3]
        $region16: #{_forward.1} parent=11 // pred_fallthru
          _
        // Predicated region
        $region17: #{_forward.1} parent=11 // pred_check
          %p327 = pneg %p65
        $region18: #{_forward.1} parent=11 // pred_check_branch
          %329 = sbr.rel (%p327) target = $region20
        $region19: #{_forward.1} parent=11 // pred_region
          %s331 = ssub.s32 1024, 1024
          %332 = vsyncadd [#allocation5], %s331
          %s333 = sshll.u32 [#allocation4], 4
          %s334 = int_to_ptr.vmem [resolvable:$true] %s333
          %339 = dma.hbm_to_vmem [thread:$0]  %s1, 1024, %s334, [#allocation5], 256, 256, 16
        $region20: #{_forward.1} parent=11 // pred_fallthru
          _
        // Predicated region
        $region21: #{_forward.1} parent=11 // pred_check
          %p340 = pneg %p86
        $region22: #{_forward.1} parent=11 // pred_check_branch
          %342 = sbr.rel (%p340) target = $region24
        $region23: #{_forward.1} parent=11 // pred_region
          %s344 = ssub.s32 64, 64
          %345 = vsyncadd [#allocation5], %s344
          %s347 = sshll.u32 [#allocation6], 4
          %s348 = int_to_ptr.vmem [resolvable:$true] %s347
          %350 = dma.hbm_to_vmem [thread:$0]  %s2, 64, %s348, [#allocation5]
        $region24: #{_forward.1} parent=11 // pred_fallthru
          _
        // Predicated region
        $region25: #{_forward.1} parent=11 // pred_check
          %p351 = pneg %p107
        $region26: #{_forward.1} parent=11 // pred_check_branch
          %353 = sbr.rel (%p351) target = $region28
        $region27: #{_forward.1} parent=11 // pred_region
          %s355 = ssub.s32 192, 192
          %356 = vsyncadd [#allocation8], %s355
          %s357 = sshll.u32 [#allocation7], 4
          %s358 = int_to_ptr.vmem [resolvable:$true] %s357
          %363 = dma.hbm_to_vmem [thread:$0]  %s3, 192, %s358, [#allocation8], 64, 64, 4
        $region28: #{_forward.1} parent=11 // pred_fallthru
          _
        // Predicated region
        $region29: #{_forward.1} parent=11 // pred_check
          %p364 = pneg %p128
        $region30: #{_forward.1} parent=11 // pred_check_branch
          %366 = sbr.rel (%p364) target = $region32
        $region31: #{_forward.1} parent=11 // pred_region
          %s368 = ssub.s32 3072, 3072
          %369 = vsyncadd [#allocation8], %s368
          %s370 = sshll.u32 [#allocation9], 4
          %s371 = int_to_ptr.vmem [resolvable:$true] %s370
          %376 = dma.hbm_to_vmem [thread:$0]  %s4, 3072, %s371, [#allocation8], 192, 192, 12
        $region32: #{_forward.1} parent=11 // pred_fallthru
          _
        // Predicated region
        $region33: #{_forward.1} parent=11 // pred_check
          %p377 = pneg %p149
        $region34: #{_forward.1} parent=11 // pred_check_branch
          %379 = sbr.rel (%p377) target = $region36
        $region35: #{_forward.1} parent=11 // pred_region
          _
        $region36: #{_forward.1} parent=11 // pred_fallthru
          _
        // Predicated region
        $region37: #{_forward.1} parent=11 // pred_check
          %p380 = pneg %p170
        $region38: #{_forward.1} parent=11 // pred_check_branch
          %382 = sbr.rel (%p380) target = $region40
        $region39: #{_forward.1} parent=11 // pred_region
          %s384 = ssub.s32 384, 384
          %385 = vsyncadd [#allocation11], %s384
          %s386 = sshll.u32 [#allocation10], 4
          %s387 = int_to_ptr.vmem [resolvable:$true] %s386
          %392 = dma.hbm_to_vmem [thread:$0]  %s6, 384, %s387, [#allocation11], 64, 64, 4
        $region40: #{_forward.1} parent=11 // pred_fallthru
          _
        // Predicated region
        $region41: #{_forward.1} parent=11 // pred_check
          %p393 = pneg %p191
        $region42: #{_forward.1} parent=11 // pred_check_branch
          %395 = sbr.rel (%p393) target = $region44
        $region43: #{_forward.1} parent=11 // pred_region
          %s397 = ssub.s32 3072, 3072
          %398 = vsyncadd [#allocation11], %s397
          %s399 = sshll.u32 [#allocation12], 4
          %s400 = int_to_ptr.vmem [resolvable:$true] %s399
          %405 = dma.hbm_to_vmem [thread:$0]  %s7, 3072, %s400, [#allocation11], 192, 192, 12
        $region44: #{_forward.1} parent=11 // pred_fallthru
          _
        // Predicated region
        $region45: #{_forward.1} parent=11 // pred_check
          %p406 = pneg %p212
        $region46: #{_forward.1} parent=11 // pred_check_branch
          %408 = sbr.rel (%p406) target = $region48
        $region47: #{_forward.1} parent=11 // pred_region
          _
        $region48: #{_forward.1} parent=11 // pred_fallthru
          _
        // Predicated region
        $region49: #{_forward.1} parent=11 // pred_check
          %p409 = pneg %p233
        $region50: #{_forward.1} parent=11 // pred_check_branch
          %411 = sbr.rel (%p409) target = $region52
        $region51: #{_forward.1} parent=11 // pred_region
          %s413 = ssub.s32 768, 768
          %414 = vsyncadd [#allocation14], %s413
          %s415 = sshll.u32 [#allocation13], 4
          %s416 = int_to_ptr.vmem [resolvable:$true] %s415
          %421 = dma.hbm_to_vmem [thread:$0]  %s9, 768, %s416, [#allocation14], 64, 64, 4
        $region52: #{_forward.1} parent=11 // pred_fallthru
          _
        // Predicated region
        $region53: #{_forward.1} parent=11 // pred_check
          %p422 = pneg %p254
        $region54: #{_forward.1} parent=11 // pred_check_branch
          %424 = sbr.rel (%p422) target = $region56
        $region55: #{_forward.1} parent=11 // pred_region
          %s426 = ssub.s32 3072, 3072
          %427 = vsyncadd [#allocation14], %s426
          %s428 = sshll.u32 [#allocation15], 4
          %s429 = int_to_ptr.vmem [resolvable:$true] %s428
          %434 = dma.hbm_to_vmem [thread:$0]  %s10, 3072, %s429, [#allocation14], 192, 192, 12
        $region56: #{_forward.1} parent=11 // pred_fallthru
          _
        // Predicated region
        $region57: #{_forward.1} parent=11 // pred_check
          %p435 = pneg %p275
        $region58: #{_forward.1} parent=11 // pred_check_branch
          %437 = sbr.rel (%p435) target = $region60
        $region59: #{_forward.1} parent=11 // pred_region
          _
        $region60: #{_forward.1} parent=11 // pred_fallthru
          _
      $region12: #{_forward.1} parent=5 // pred_fallthru
        _
      %p438 = scmp.lt.s32.totalorder %s23, 2
      // Predicated region
      $region61: #{_forward.1} parent=5 // pred_check
        %p439 = pneg %p438
      $region62: #{_forward.1} parent=5 // pred_check_branch
        %441 = sbr.rel (%p439) target = $region64
      $region63: #{_forward.1} parent=5 // pred_region
        _
      $region64: #{_forward.1} parent=5 // pred_fallthru
        _
      %p442 = scmp.le.s32.totalorder 1, %s23
      %p443 = scmp.lt.s32.totalorder %s23, 3
      %p444 = pnand %p442, %p443
      %p445 = pneg %p444
      // Predicated region
      $region65: #{_forward.1} parent=5 // pred_check
        _
      $region66: #{_forward.1} parent=5 // pred_check_branch
        %447 = sbr.rel (%p444) target = $region68
      $region67: #{_forward.1} parent=5 // pred_region
        %s448 = ssub.s32 %s23, 1
        // Predicated region
        $region69: #{_forward.1} parent=67 // pred_check
          %p449 = pneg %p44
        $region70: #{_forward.1} parent=67 // pred_check_branch
          %451 = sbr.rel (%p449) target = $region72
        $region71: #{_forward.1} parent=67 // pred_region
          %452 = dma.done [#allocation3], 32
        $region72: #{_forward.1} parent=67 // pred_fallthru
          _
        // Predicated region
        $region73: #{_forward.1} parent=67 // pred_check
          %p453 = pneg %p65
        $region74: #{_forward.1} parent=67 // pred_check_branch
          %455 = sbr.rel (%p453) target = $region76
        $region75: #{_forward.1} parent=67 // pred_region
          %456 = dma.done [#allocation5], 1024
        $region76: #{_forward.1} parent=67 // pred_fallthru
          _
        // Predicated region
        $region77: #{_forward.1} parent=67 // pred_check
          %p457 = pneg %p86
        $region78: #{_forward.1} parent=67 // pred_check_branch
          %459 = sbr.rel (%p457) target = $region80
        $region79: #{_forward.1} parent=67 // pred_region
          %460 = dma.done [#allocation5], 64
        $region80: #{_forward.1} parent=67 // pred_fallthru
          _
        // Predicated region
        $region81: #{_forward.1} parent=67 // pred_check
          %p461 = pneg %p107
        $region82: #{_forward.1} parent=67 // pred_check_branch
          %463 = sbr.rel (%p461) target = $region84
        $region83: #{_forward.1} parent=67 // pred_region
          %464 = dma.done [#allocation8], 192
        $region84: #{_forward.1} parent=67 // pred_fallthru
          _
        // Predicated region
        $region85: #{_forward.1} parent=67 // pred_check
          %p465 = pneg %p128
        $region86: #{_forward.1} parent=67 // pred_check_branch
          %467 = sbr.rel (%p465) target = $region88
        $region87: #{_forward.1} parent=67 // pred_region
          %468 = dma.done [#allocation8], 3072
        $region88: #{_forward.1} parent=67 // pred_fallthru
          _
        // Predicated region
        $region89: #{_forward.1} parent=67 // pred_check
          %p469 = pneg %p170
        $region90: #{_forward.1} parent=67 // pred_check_branch
          %471 = sbr.rel (%p469) target = $region92
        $region91: #{_forward.1} parent=67 // pred_region
          %472 = dma.done [#allocation11], 384
        $region92: #{_forward.1} parent=67 // pred_fallthru
          _
        // Predicated region
        $region93: #{_forward.1} parent=67 // pred_check
          %p473 = pneg %p191
        $region94: #{_forward.1} parent=67 // pred_check_branch
          %475 = sbr.rel (%p473) target = $region96
        $region95: #{_forward.1} parent=67 // pred_region
          %476 = dma.done [#allocation11], 3072
        $region96: #{_forward.1} parent=67 // pred_fallthru
          _
        // Predicated region
        $region97: #{_forward.1} parent=67 // pred_check
          %p477 = pneg %p233
        $region98: #{_forward.1} parent=67 // pred_check_branch
          %479 = sbr.rel (%p477) target = $region100
        $region99: #{_forward.1} parent=67 // pred_region
          %480 = dma.done [#allocation14], 768
        $region100: #{_forward.1} parent=67 // pred_fallthru
          _
        // Predicated region
        $region101: #{_forward.1} parent=67 // pred_check
          %p481 = pneg %p254
        $region102: #{_forward.1} parent=67 // pred_check_branch
          %483 = sbr.rel (%p481) target = $region104
        $region103: #{_forward.1} parent=67 // pred_region
          %484 = dma.done [#allocation14], 3072
        $region104: #{_forward.1} parent=67 // pred_fallthru
          _
        %p485 = pneg %p44
        %p486 = pneg %p41
        %p487 = pneg %p65
        %p488 = pneg %p62
        %p489 = pneg %p86
        %p490 = pneg %p83
        %p491 = pneg %p107
        %p492 = pneg %p104
        %p493 = pneg %p128
        %p494 = pneg %p125
        %p495 = pneg %p149
        %p496 = pneg %p146
        %p497 = pneg %p170
        %p498 = pneg %p167
        %p499 = pneg %p191
        %p500 = pneg %p188
        %p501 = pneg %p212
        %p502 = pneg %p209
        %p503 = pneg %p233
        %p504 = pneg %p230
        %p505 = pneg %p254
        %p506 = pneg %p251
        %p507 = pneg %p275
        %p508 = pneg %p272
        %p509 = pneg %p301
        %p510 = pneg %p298
        %s511 = smul.u32 4, %s28
        %p512 = scmp.lt.s32.totalorder %s511, 7
        %s513 = scalar_select %p512, %s511, 7
        %s514 = smul.addr %s513, 8
        %s515 = scalar_lea.vmem %s12, %s514
        %s516 = smul.u32 4, %s28
        %p517 = scmp.lt.s32.totalorder %s516, 7
        %s518 = scalar_select %p517, %s516, 7
        %s519 = smul.addr %s518, 8
        %s520 = scalar_lea.vmem %s12, %s519
        %s521 = smul.u32 4, %s28
        %s523 = scalar_lea.vmem [#allocation2], %s28
        %v524 = vld [vmem:[%s523] sm:$0x1]
        %v525 = vpack.c.bf16 %v524, %v524
        %v526 = vld [vmem:[#allocation4] sm:$0xff]
        %v527 = vld [vmem:[#allocation4 + $0x8] sm:$0xff]
        %v528 = vld [vmem:[#allocation4 + $0x10] sm:$0xff]
        %v529 = vld [vmem:[#allocation4 + $0x18] sm:$0xff]
        %v530 = vld [vmem:[#allocation4 + $0x20] sm:$0xff]
        %v531 = vld [vmem:[#allocation4 + $0x28] sm:$0xff]
        %v532 = vld [vmem:[#allocation4 + $0x30] sm:$0xff]
        %v533 = vld [vmem:[#allocation4 + $0x38] sm:$0xff]
        %v534 = vld [vmem:[#allocation6] sm:$0xf]
        %v543 = vunpack.c.l.b16 %v526
        %v544 = vunpack.c.h.b16 %v526
        %v545 = vunpack.c.l.b16 %v527
        %v546 = vunpack.c.h.b16 %v527
        %v547 = vunpack.c.l.b16 %v528
        %v548 = vunpack.c.h.b16 %v528
        %v549 = vunpack.c.l.b16 %v529
        %v550 = vunpack.c.h.b16 %v529
        %v551 = vunpack.c.l.b16 %v530
        %v552 = vunpack.c.h.b16 %v530
        %v553 = vunpack.c.l.b16 %v531
        %v554 = vunpack.c.h.b16 %v531
        %v555 = vunpack.c.l.b16 %v532
        %v556 = vunpack.c.h.b16 %v532
        %v557 = vunpack.c.l.b16 %v533
        %v558 = vunpack.c.h.b16 %v533
        %v559 = vpack.c.b16 %v547, %v543
        %v560 = vpack.c.b16 %v548, %v544
        %v561 = vpack.c.b16 %v549, %v545
        %v562 = vpack.c.b16 %v550, %v546
        %v563 = vpack.c.b16 %v555, %v551
        %v564 = vpack.c.b16 %v556, %v552
        %v565 = vpack.c.b16 %v557, %v553
        %v566 = vpack.c.b16 %v558, %v554
        %v576 = vlaneseq
        %v577 = vshrl.u32 %v576, 7
        %v578 = vsub.s32 0, %v577
        %v579 = vrot.slane %v534, %v578
        %v580 = vlaneseq
        %v581 = vshrl.u32 %v580, 7
        %v582 = vsub.s32 1, %v581
        %v583 = vrot.slane %v534, %v582
        %v584 = vlaneseq
        %v585 = vshrl.u32 %v584, 7
        %v586 = vsub.s32 2, %v585
        %v587 = vrot.slane %v534, %v586
        %v588 = vlaneseq
        %v589 = vshrl.u32 %v588, 7
        %v590 = vsub.s32 3, %v589
        %v591 = vrot.slane %v534, %v590
        %vm596 = vcmask 261120
        %v598 = vsel %vm596, %v525, 0
        %600 = vmatprep.subr.bf16.mxu0 0
        %601 = vmatpush1.bf16.msra.mxu0 0
        %602 = vmatprep.subr.bf16.mxu0 0
        %603 = vmatpush1.bf16.msra.mxu0 0
        %604 = vmatprep.subr.bf16.mxu0 0
        %605 = vmatpush1.bf16.msra.mxu0 0
        %606 = vmatprep.subr.bf16.mxu0 0
        %607 = vmatpush1.bf16.msra.mxu0 0
        %608 = vmatprep.subr.bf16.mxu0 0
        %609 = vmatpush1.bf16.msra.mxu0 0
        %610 = vmatprep.subr.bf16.mxu0 0
        %611 = vmatpush1.bf16.msra.mxu0 0
        %612 = vmatprep.subr.bf16.mxu0 %v564
        %613 = vmatpush1.bf16.msra.mxu0 %v563
        %614 = vmatprep.subr.bf16.mxu0 %v560
        %615 = vmatpush1.bf16.msra.mxu0 %v559
        %616 = vmatprep.subr.bf16.mxu0 0
        %617 = vmatpush2.bf16.msra.mxu0 0
        %618 = vmatprep.subr.bf16.mxu0 0
        %619 = vmatpush2.bf16.msra.mxu0 0
        %620 = vmatprep.subr.bf16.mxu0 0
        %621 = vmatpush2.bf16.msra.mxu0 0
        %622 = vmatprep.subr.bf16.mxu0 0
        %623 = vmatpush2.bf16.msra.mxu0 0
        %624 = vmatprep.subr.bf16.mxu0 0
        %625 = vmatpush2.bf16.msra.mxu0 0
        %626 = vmatprep.subr.bf16.mxu0 0
        %627 = vmatpush2.bf16.msra.mxu0 0
        %628 = vmatprep.subr.bf16.mxu0 0
        %629 = vmatpush2.bf16.msra.mxu0 0
        %630 = vmatprep.subr.bf16.mxu0 0
        %631 = vmatpush2.bf16.msra.mxu0 0
        %632 = vmatprep.mubr.bf16.mxu0 0
        %633 = vmatmul.mubr.bf16.gmra.mxu0 %v598
        %v634 = vpop.f32.mrf.mxu0
        %v635 = vadd.f32 %v579, %v634
        %v636 = vpop.f32.mrf.mxu0
        %v637 = vadd.f32 %v583, %v636
        %v638 = vpop.f32.mrf.mxu0
        %v639 = vpop.f32.mrf.mxu0
        %640 = vdwg.mxu0
        %641 = vmatprep.subr.bf16.mxu0 0
        %642 = vmatpush1.bf16.msra.mxu0 0
        %643 = vmatprep.subr.bf16.mxu0 0
        %644 = vmatpush1.bf16.msra.mxu0 0
        %645 = vmatprep.subr.bf16.mxu0 0
        %646 = vmatpush1.bf16.msra.mxu0 0
        %647 = vmatprep.subr.bf16.mxu0 0
        %648 = vmatpush1.bf16.msra.mxu0 0
        %649 = vmatprep.subr.bf16.mxu0 0
        %650 = vmatpush1.bf16.msra.mxu0 0
        %651 = vmatprep.subr.bf16.mxu0 0
        %652 = vmatpush1.bf16.msra.mxu0 0
        %653 = vmatprep.subr.bf16.mxu0 %v566
        %654 = vmatpush1.bf16.msra.mxu0 %v565
        %655 = vmatprep.subr.bf16.mxu0 %v562
        %656 = vmatpush1.bf16.msra.mxu0 %v561
        %657 = vmatprep.subr.bf16.mxu0 0
        %658 = vmatpush2.bf16.msra.mxu0 0
        %659 = vmatprep.subr.bf16.mxu0 0
        %660 = vmatpush2.bf16.msra.mxu0 0
        %661 = vmatprep.subr.bf16.mxu0 0
        %662 = vmatpush2.bf16.msra.mxu0 0
        %663 = vmatprep.subr.bf16.mxu0 0
        %664 = vmatpush2.bf16.msra.mxu0 0
        %665 = vmatprep.subr.bf16.mxu0 0
        %666 = vmatpush2.bf16.msra.mxu0 0
        %667 = vmatprep.subr.bf16.mxu0 0
        %668 = vmatpush2.bf16.msra.mxu0 0
        %669 = vmatprep.subr.bf16.mxu0 0
        %670 = vmatpush2.bf16.msra.mxu0 0
        %671 = vmatprep.subr.bf16.mxu0 0
        %672 = vmatpush2.bf16.msra.mxu0 0
        %673 = vmatprep.mubr.bf16.mxu0 0
        %674 = vmatmul.mubr.bf16.gmra.mxu0 %v598
        %v675 = vpop.f32.mrf.mxu0
        %v676 = vadd.f32 %v587, %v675
        %v677 = vpop.f32.mrf.mxu0
        %v678 = vadd.f32 %v591, %v677
        %v679 = vpop.f32.mrf.mxu0
        %v680 = vpop.f32.mrf.mxu0
        %681 = vdwg.mxu0
        %v682 = vlaneseq
        %v683 = vshrl.u32 %v682, 7
        %vm684 = vcmp.eq.s32.totalorder %v683, 0
        %v685 = vsel %vm684, 1, 0
        %v686 = vcvt.s32.f32 %v685
        %v687 = vlaneseq
        %v688 = vshrl.u32 %v687, 7
        %v689 = vsub.s32 0, %v688
        %v690 = vrot.slane %v635, %v689
        %v691 = vmul.f32 %v686, %v690
        %v692 = vadd.f32 %v691, 0.0
        %vm693 = vcmp.eq.s32.totalorder %v683, 1
        %v694 = vsel %vm693, 1, 0
        %v695 = vcvt.s32.f32 %v694
        %v696 = vlaneseq
        %v697 = vshrl.u32 %v696, 7
        %v698 = vsub.s32 0, %v697
        %v699 = vrot.slane %v637, %v698
        %v700 = vmul.f32 %v695, %v699
        %v701 = vadd.f32 %v692, %v700
        %vm702 = vcmp.eq.s32.totalorder %v683, 2
        %v703 = vsel %vm702, 1, 0
        %v704 = vcvt.s32.f32 %v703
        %v705 = vlaneseq
        %v706 = vshrl.u32 %v705, 7
        %v707 = vsub.s32 0, %v706
        %v708 = vrot.slane %v676, %v707
        %v709 = vmul.f32 %v704, %v708
        %v710 = vadd.f32 %v701, %v709
        %vm711 = vcmp.eq.s32.totalorder %v683, 3
        %v712 = vsel %vm711, 1, 0
        %v713 = vcvt.s32.f32 %v712
        %v714 = vlaneseq
        %v715 = vshrl.u32 %v714, 7
        %v716 = vsub.s32 0, %v715
        %v717 = vrot.slane %v678, %v716
        %v718 = vmul.f32 %v713, %v717
        %v719 = vadd.f32 %v710, %v718
        %v720 = vpack.c.bf16 %v719, %v719
        %v721 = vld [vmem:[#allocation9] sm:$0xff]
        %v722 = vld [vmem:[#allocation9 + $0x8] sm:$0xf]
        %v723 = vld [vmem:[#allocation9 + $0xc] sm:$0xff]
        %v724 = vld [vmem:[#allocation9 + $0x14] sm:$0xf]
        %v725 = vld [vmem:[#allocation9 + $0x18] sm:$0xff]
        %v726 = vld [vmem:[#allocation9 + $0x20] sm:$0xf]
        %v727 = vld [vmem:[#allocation9 + $0x24] sm:$0xff]
        %v728 = vld [vmem:[#allocation9 + $0x2c] sm:$0xf]
        %v729 = vld [vmem:[#allocation9 + $0x30] sm:$0xff]
        %v730 = vld [vmem:[#allocation9 + $0x38] sm:$0xf]
        %v731 = vld [vmem:[#allocation9 + $0x3c] sm:$0xff]
        %v732 = vld [vmem:[#allocation9 + $0x44] sm:$0xf]
        %v733 = vld [vmem:[#allocation9 + $0x48] sm:$0xff]
        %v734 = vld [vmem:[#allocation9 + $0x50] sm:$0xf]
        %v735 = vld [vmem:[#allocation9 + $0x54] sm:$0xff]
        %v736 = vld [vmem:[#allocation9 + $0x5c] sm:$0xf]
        %v737 = vld [vmem:[#allocation9 + $0x60] sm:$0xff]
        %v738 = vld [vmem:[#allocation9 + $0x68] sm:$0xf]
        %v739 = vld [vmem:[#allocation9 + $0x6c] sm:$0xff]
        %v740 = vld [vmem:[#allocation9 + $0x74] sm:$0xf]
        %v741 = vld [vmem:[#allocation9 + $0x78] sm:$0xff]
        %v742 = vld [vmem:[#allocation9 + $0x80] sm:$0xf]
        %v743 = vld [vmem:[#allocation9 + $0x84] sm:$0xff]
        %v744 = vld [vmem:[#allocation9 + $0x8c] sm:$0xf]
        %v745 = vld [vmem:[#allocation9 + $0x90] sm:$0xff]
        %v746 = vld [vmem:[#allocation9 + $0x98] sm:$0xf]
        %v747 = vld [vmem:[#allocation9 + $0x9c] sm:$0xff]
        %v748 = vld [vmem:[#allocation9 + $0xa4] sm:$0xf]
        %v749 = vld [vmem:[#allocation9 + $0xa8] sm:$0xff]
        %v750 = vld [vmem:[#allocation9 + $0xb0] sm:$0xf]
        %v751 = vld [vmem:[#allocation9 + $0xb4] sm:$0xff]
        %v752 = vld [vmem:[#allocation9 + $0xbc] sm:$0xf]
        %v785 = vunpack.c.l.b16 %v721
        %v786 = vunpack.c.h.b16 %v721
        %v787 = vunpack.c.l.b16 %v722
        %v788 = vunpack.c.l.b16 %v723
        %v789 = vunpack.c.h.b16 %v723
        %v790 = vunpack.c.l.b16 %v724
        %v791 = vunpack.c.l.b16 %v725
        %v792 = vunpack.c.h.b16 %v725
        %v793 = vunpack.c.l.b16 %v726
        %v794 = vunpack.c.l.b16 %v727
        %v795 = vunpack.c.h.b16 %v727
        %v796 = vunpack.c.l.b16 %v728
        %v797 = vunpack.c.l.b16 %v729
        %v798 = vunpack.c.h.b16 %v729
        %v799 = vunpack.c.l.b16 %v730
        %v800 = vunpack.c.l.b16 %v731
        %v801 = vunpack.c.h.b16 %v731
        %v802 = vunpack.c.l.b16 %v732
        %v803 = vunpack.c.l.b16 %v733
        %v804 = vunpack.c.h.b16 %v733
        %v805 = vunpack.c.l.b16 %v734
        %v806 = vunpack.c.l.b16 %v735
        %v807 = vunpack.c.h.b16 %v735
        %v808 = vunpack.c.l.b16 %v736
        %v809 = vunpack.c.l.b16 %v737
        %v810 = vunpack.c.h.b16 %v737
        %v811 = vunpack.c.l.b16 %v738
        %v812 = vunpack.c.l.b16 %v739
        %v813 = vunpack.c.h.b16 %v739
        %v814 = vunpack.c.l.b16 %v740
        %v815 = vunpack.c.l.b16 %v741
        %v816 = vunpack.c.h.b16 %v741
        %v817 = vunpack.c.l.b16 %v742
        %v818 = vunpack.c.l.b16 %v743
        %v819 = vunpack.c.h.b16 %v743
        %v820 = vunpack.c.l.b16 %v744
        %v821 = vunpack.c.l.b16 %v745
        %v822 = vunpack.c.h.b16 %v745
        %v823 = vunpack.c.l.b16 %v746
        %v824 = vunpack.c.l.b16 %v747
        %v825 = vunpack.c.h.b16 %v747
        %v826 = vunpack.c.l.b16 %v748
        %v827 = vunpack.c.l.b16 %v749
        %v828 = vunpack.c.h.b16 %v749
        %v829 = vunpack.c.l.b16 %v750
        %v830 = vunpack.c.l.b16 %v751
        %v831 = vunpack.c.h.b16 %v751
        %v832 = vunpack.c.l.b16 %v752
        %v833 = vpack.c.b16 %v788, %v785
        %v834 = vpack.c.b16 %v789, %v786
        %v835 = vpack.c.b16 %v790, %v787
        %v836 = vpack.c.b16 %v794, %v791
        %v837 = vpack.c.b16 %v795, %v792
        %v838 = vpack.c.b16 %v796, %v793
        %v839 = vpack.c.b16 %v800, %v797
        %v840 = vpack.c.b16 %v801, %v798
        %v841 = vpack.c.b16 %v802, %v799
        %v842 = vpack.c.b16 %v806, %v803
        %v843 = vpack.c.b16 %v807, %v804
        %v844 = vpack.c.b16 %v808, %v805
        %v845 = vpack.c.b16 %v812, %v809
        %v846 = vpack.c.b16 %v813, %v810
        %v847 = vpack.c.b16 %v814, %v811
        %v848 = vpack.c.b16 %v818, %v815
        %v849 = vpack.c.b16 %v819, %v816
        %v850 = vpack.c.b16 %v820, %v817
        %v851 = vpack.c.b16 %v824, %v821
        %v852 = vpack.c.b16 %v825, %v822
        %v853 = vpack.c.b16 %v826, %v823
        %v854 = vpack.c.b16 %v830, %v827
        %v855 = vpack.c.b16 %v831, %v828
        %v856 = vpack.c.b16 %v832, %v829
        %881 = vmatprep.subr.bf16.mxu0 %v855
        %882 = vmatpush1.bf16.msra.mxu0 %v854
        %883 = vmatprep.subr.bf16.mxu0 %v852
        %884 = vmatpush1.bf16.msra.mxu0 %v851
        %885 = vmatprep.subr.bf16.mxu0 %v849
        %886 = vmatpush1.bf16.msra.mxu0 %v848
        %887 = vmatprep.subr.bf16.mxu0 %v846
        %888 = vmatpush1.bf16.msra.mxu0 %v845
        %889 = vmatprep.subr.bf16.mxu0 %v843
        %890 = vmatpush1.bf16.msra.mxu0 %v842
        %891 = vmatprep.subr.bf16.mxu0 %v840
        %892 = vmatpush1.bf16.msra.mxu0 %v839
        %893 = vmatprep.subr.bf16.mxu0 %v837
        %894 = vmatpush1.bf16.msra.mxu0 %v836
        %895 = vmatprep.subr.bf16.mxu0 %v834
        %896 = vmatpush1.bf16.msra.mxu0 %v833
        %897 = vmatprep.subr.bf16.mxu0 0
        %898 = vmatpush2.bf16.msra.mxu0 0
        %899 = vmatprep.subr.bf16.mxu0 0
        %900 = vmatpush2.bf16.msra.mxu0 0
        %901 = vmatprep.subr.bf16.mxu0 0
        %902 = vmatpush2.bf16.msra.mxu0 0
        %903 = vmatprep.subr.bf16.mxu0 0
        %904 = vmatpush2.bf16.msra.mxu0 0
        %905 = vmatprep.subr.bf16.mxu0 0
        %906 = vmatpush2.bf16.msra.mxu0 0
        %907 = vmatprep.subr.bf16.mxu0 0
        %908 = vmatpush2.bf16.msra.mxu0 0
        %909 = vmatprep.subr.bf16.mxu0 0
        %910 = vmatpush2.bf16.msra.mxu0 0
        %911 = vmatprep.subr.bf16.mxu0 0
        %912 = vmatpush2.bf16.msra.mxu0 0
        %913 = vmatprep.mubr.bf16.mxu0 0
        %914 = vmatmul.mubr.bf16.gmra.mxu0 %v720
        %v915 = vpop.f32.mrf.mxu0
        %v916 = vadd.f32 0.0, %v915
        %v917 = vpop.f32.mrf.mxu0
        %v918 = vadd.f32 0.0, %v917
        %v919 = vpop.f32.mrf.mxu0
        %v920 = vpop.f32.mrf.mxu0
        %921 = vdwg.mxu0
        %922 = vmatprep.subr.bf16.mxu0 0
        %923 = vmatpush1.bf16.msra.mxu0 %v856
        %924 = vmatprep.subr.bf16.mxu0 0
        %925 = vmatpush1.bf16.msra.mxu0 %v853
        %926 = vmatprep.subr.bf16.mxu0 0
        %927 = vmatpush1.bf16.msra.mxu0 %v850
        %928 = vmatprep.subr.bf16.mxu0 0
        %929 = vmatpush1.bf16.msra.mxu0 %v847
        %930 = vmatprep.subr.bf16.mxu0 0
        %931 = vmatpush1.bf16.msra.mxu0 %v844
        %932 = vmatprep.subr.bf16.mxu0 0
        %933 = vmatpush1.bf16.msra.mxu0 %v841
        %934 = vmatprep.subr.bf16.mxu0 0
        %935 = vmatpush1.bf16.msra.mxu0 %v838
        %936 = vmatprep.subr.bf16.mxu0 0
        %937 = vmatpush1.bf16.msra.mxu0 %v835
        %938 = vmatprep.subr.bf16.mxu0 0
        %939 = vmatpush2.bf16.msra.mxu0 0
        %940 = vmatprep.subr.bf16.mxu0 0
        %941 = vmatpush2.bf16.msra.mxu0 0
        %942 = vmatprep.subr.bf16.mxu0 0
        %943 = vmatpush2.bf16.msra.mxu0 0
        %944 = vmatprep.subr.bf16.mxu0 0
        %945 = vmatpush2.bf16.msra.mxu0 0
        %946 = vmatprep.subr.bf16.mxu0 0
        %947 = vmatpush2.bf16.msra.mxu0 0
        %948 = vmatprep.subr.bf16.mxu0 0
        %949 = vmatpush2.bf16.msra.mxu0 0
        %950 = vmatprep.subr.bf16.mxu0 0
        %951 = vmatpush2.bf16.msra.mxu0 0
        %952 = vmatprep.subr.bf16.mxu0 0
        %953 = vmatpush2.bf16.msra.mxu0 0
        %954 = vmatprep.mubr.bf16.mxu0 0
        %955 = vmatmul.mubr.bf16.gmra.mxu0 %v720
        %v956 = vpop.f32.mrf.mxu0
        %v957 = vadd.f32 0.0, %v956
        %v958 = vpop.f32.mrf.mxu0
        %v959 = vpop.f32.mrf.mxu0
        %v960 = vpop.f32.mrf.mxu0
        %961 = vdwg.mxu0
        %v962 = vpack.c.bf16 %v916, %v916
        %v963 = vpack.c.bf16 %v918, %v918
        %v964 = vpack.c.bf16 %v957, %v957
        %v965 = vld [vmem:[#allocation7] sm:$0xf]
        %s966 = scalar_lea.vmem [#allocation7], 4
        %v967 = vld [vmem:[%s966] sm:$0xf]
        %vm968 = vcmask 64512
        %v970 = vsel %vm968, %v967, 0
        %vm972 = vcmask 1043456
        %v974 = vsel %vm972, %v963, 0
        %976 = vmatprep.subr.bf16.mxu0 0
        %977 = vmatpush1.bf16.msra.mxu0 0
        %978 = vmatprep.subr.bf16.mxu0 0
        %979 = vmatpush1.bf16.msra.mxu0 0
        %980 = vmatprep.subr.bf16.mxu0 0
        %981 = vmatpush1.bf16.msra.mxu0 0
        %982 = vmatprep.subr.bf16.mxu0 0
        %983 = vmatpush1.bf16.msra.mxu0 0
        %984 = vmatprep.subr.bf16.mxu0 0
        %985 = vmatpush1.bf16.msra.mxu0 0
        %986 = vmatprep.subr.bf16.mxu0 0
        %987 = vmatpush1.bf16.msra.mxu0 0
        %988 = vmatprep.subr.bf16.mxu0 0
        %989 = vmatpush1.bf16.msra.mxu0 0
        %990 = vmatprep.subr.bf16.mxu0 0
        %991 = vmatpush1.bf16.msra.mxu0 %v974
        %992 = vmatprep.subr.bf16.mxu0 0
        %993 = vmatpush2.bf16.msra.mxu0 0
        %994 = vmatprep.subr.bf16.mxu0 0
        %995 = vmatpush2.bf16.msra.mxu0 0
        %996 = vmatprep.subr.bf16.mxu0 0
        %997 = vmatpush2.bf16.msra.mxu0 0
        %998 = vmatprep.subr.bf16.mxu0 0
        %999 = vmatpush2.bf16.msra.mxu0 0
        %1000 = vmatprep.subr.bf16.mxu0 0
        %1001 = vmatpush2.bf16.msra.mxu0 0
        %1002 = vmatprep.subr.bf16.mxu0 0
        %1003 = vmatpush2.bf16.msra.mxu0 0
        %1004 = vmatprep.subr.bf16.mxu0 0
        %1005 = vmatpush2.bf16.msra.mxu0 0
        %1006 = vmatprep.subr.bf16.mxu0 0
        %1007 = vmatpush2.bf16.msra.mxu0 0
        %1008 = vmatprep.mubr.bf16.mxu0 0
        %1009 = vmatmul.mubr.bf16.gmra.mxu0 %v970
        %v1010 = vpop.f32.mrf.mxu0
        %v1011 = vadd.f32 0.0, %v1010
        %v1012 = vpop.f32.mrf.mxu0
        %v1013 = vpop.f32.mrf.mxu0
        %v1014 = vpop.f32.mrf.mxu0
        %1015 = vdwg.mxu0
        %v1017 = vsel %vm968, %v965, 0
        %v1020 = vsel %vm972, %v962, 0
        %1022 = vmatprep.subr.bf16.mxu0 0
        %1023 = vmatpush1.bf16.msra.mxu0 0
        %1024 = vmatprep.subr.bf16.mxu0 0
        %1025 = vmatpush1.bf16.msra.mxu0 0
        %1026 = vmatprep.subr.bf16.mxu0 0
        %1027 = vmatpush1.bf16.msra.mxu0 0
        %1028 = vmatprep.subr.bf16.mxu0 0
        %1029 = vmatpush1.bf16.msra.mxu0 0
        %1030 = vmatprep.subr.bf16.mxu0 0
        %1031 = vmatpush1.bf16.msra.mxu0 0
        %1032 = vmatprep.subr.bf16.mxu0 0
        %1033 = vmatpush1.bf16.msra.mxu0 0
        %1034 = vmatprep.subr.bf16.mxu0 0
        %1035 = vmatpush1.bf16.msra.mxu0 0
        %1036 = vmatprep.subr.bf16.mxu0 0
        %1037 = vmatpush1.bf16.msra.mxu0 %v1020
        %1038 = vmatprep.subr.bf16.mxu0 0
        %1039 = vmatpush2.bf16.msra.mxu0 0
        %1040 = vmatprep.subr.bf16.mxu0 0
        %1041 = vmatpush2.bf16.msra.mxu0 0
        %1042 = vmatprep.subr.bf16.mxu0 0
        %1043 = vmatpush2.bf16.msra.mxu0 0
        %1044 = vmatprep.subr.bf16.mxu0 0
        %1045 = vmatpush2.bf16.msra.mxu0 0
        %1046 = vmatprep.subr.bf16.mxu0 0
        %1047 = vmatpush2.bf16.msra.mxu0 0
        %1048 = vmatprep.subr.bf16.mxu0 0
        %1049 = vmatpush2.bf16.msra.mxu0 0
        %1050 = vmatprep.subr.bf16.mxu0 0
        %1051 = vmatpush2.bf16.msra.mxu0 0
        %1052 = vmatprep.subr.bf16.mxu0 0
        %1053 = vmatpush2.bf16.msra.mxu0 0
        %1054 = vmatprep.mubr.bf16.mxu0 0
        %1055 = vmatmul.mubr.bf16.gmra.mxu0 %v1017
        %v1056 = vpop.f32.mrf.mxu0
        %v1057 = vadd.f32 %v1011, %v1056
        %v1058 = vpop.f32.mrf.mxu0
        %v1059 = vpop.f32.mrf.mxu0
        %v1060 = vpop.f32.mrf.mxu0
        %1061 = vdwg.mxu0
        %s1062 = scalar_lea.vmem [#allocation7], 8
        %v1063 = vld [vmem:[%s1062] sm:$0xf]
        %v1065 = vsel %vm968, %v1063, 0
        %v1068 = vsel %vm972, %v964, 0
        %1070 = vmatprep.subr.bf16.mxu0 0
        %1071 = vmatpush1.bf16.msra.mxu0 0
        %1072 = vmatprep.subr.bf16.mxu0 0
        %1073 = vmatpush1.bf16.msra.mxu0 0
        %1074 = vmatprep.subr.bf16.mxu0 0
        %1075 = vmatpush1.bf16.msra.mxu0 0
        %1076 = vmatprep.subr.bf16.mxu0 0
        %1077 = vmatpush1.bf16.msra.mxu0 0
        %1078 = vmatprep.subr.bf16.mxu0 0
        %1079 = vmatpush1.bf16.msra.mxu0 0
        %1080 = vmatprep.subr.bf16.mxu0 0
        %1081 = vmatpush1.bf16.msra.mxu0 0
        %1082 = vmatprep.subr.bf16.mxu0 0
        %1083 = vmatpush1.bf16.msra.mxu0 0
        %1084 = vmatprep.subr.bf16.mxu0 0
        %1085 = vmatpush1.bf16.msra.mxu0 %v1068
        %1086 = vmatprep.subr.bf16.mxu0 0
        %1087 = vmatpush2.bf16.msra.mxu0 0
        %1088 = vmatprep.subr.bf16.mxu0 0
        %1089 = vmatpush2.bf16.msra.mxu0 0
        %1090 = vmatprep.subr.bf16.mxu0 0
        %1091 = vmatpush2.bf16.msra.mxu0 0
        %1092 = vmatprep.subr.bf16.mxu0 0
        %1093 = vmatpush2.bf16.msra.mxu0 0
        %1094 = vmatprep.subr.bf16.mxu0 0
        %1095 = vmatpush2.bf16.msra.mxu0 0
        %1096 = vmatprep.subr.bf16.mxu0 0
        %1097 = vmatpush2.bf16.msra.mxu0 0
        %1098 = vmatprep.subr.bf16.mxu0 0
        %1099 = vmatpush2.bf16.msra.mxu0 0
        %1100 = vmatprep.subr.bf16.mxu0 0
        %1101 = vmatpush2.bf16.msra.mxu0 0
        %1102 = vmatprep.mubr.bf16.mxu0 0
        %1103 = vmatmul.mubr.bf16.gmra.mxu0 %v1065
        %v1104 = vpop.f32.mrf.mxu0
        %v1105 = vadd.f32 0.0, %v1104
        %v1106 = vpop.f32.mrf.mxu0
        %v1107 = vpop.f32.mrf.mxu0
        %v1108 = vpop.f32.mrf.mxu0
        %1109 = vdwg.mxu0
        %v1110 = vadd.f32 %v1057, %v1105
        %v1111 = vld [vmem:[%s5] sm:$0x1]
        %v1113 = vlaneseq
        %v1114 = vshrl.u32 %v1113, 7
        %v1115 = vsub.s32 0, %v1114
        %v1116 = vrot.slane %v1111, %v1115
        %v1118 = vadd.f32 %v1110, %v1116
        %v1119 = vmax.f32 %v1118, 0.0
        %v1120 = vpack.c.bf16 %v1119, %v1119
        %v1121 = vld [vmem:[#allocation12] sm:$0xff]
        %v1122 = vld [vmem:[#allocation12 + $0x8] sm:$0xf]
        %v1123 = vld [vmem:[#allocation12 + $0xc] sm:$0xff]
        %v1124 = vld [vmem:[#allocation12 + $0x14] sm:$0xf]
        %v1125 = vld [vmem:[#allocation12 + $0x18] sm:$0xff]
        %v1126 = vld [vmem:[#allocation12 + $0x20] sm:$0xf]
        %v1127 = vld [vmem:[#allocation12 + $0x24] sm:$0xff]
        %v1128 = vld [vmem:[#allocation12 + $0x2c] sm:$0xf]
        %v1129 = vld [vmem:[#allocation12 + $0x30] sm:$0xff]
        %v1130 = vld [vmem:[#allocation12 + $0x38] sm:$0xf]
        %v1131 = vld [vmem:[#allocation12 + $0x3c] sm:$0xff]
        %v1132 = vld [vmem:[#allocation12 + $0x44] sm:$0xf]
        %v1133 = vld [vmem:[#allocation12 + $0x48] sm:$0xff]
        %v1134 = vld [vmem:[#allocation12 + $0x50] sm:$0xf]
        %v1135 = vld [vmem:[#allocation12 + $0x54] sm:$0xff]
        %v1136 = vld [vmem:[#allocation12 + $0x5c] sm:$0xf]
        %v1137 = vld [vmem:[#allocation12 + $0x60] sm:$0xff]
        %v1138 = vld [vmem:[#allocation12 + $0x68] sm:$0xf]
        %v1139 = vld [vmem:[#allocation12 + $0x6c] sm:$0xff]
        %v1140 = vld [vmem:[#allocation12 + $0x74] sm:$0xf]
        %v1141 = vld [vmem:[#allocation12 + $0x78] sm:$0xff]
        %v1142 = vld [vmem:[#allocation12 + $0x80] sm:$0xf]
        %v1143 = vld [vmem:[#allocation12 + $0x84] sm:$0xff]
        %v1144 = vld [vmem:[#allocation12 + $0x8c] sm:$0xf]
        %v1145 = vld [vmem:[#allocation12 + $0x90] sm:$0xff]
        %v1146 = vld [vmem:[#allocation12 + $0x98] sm:$0xf]
        %v1147 = vld [vmem:[#allocation12 + $0x9c] sm:$0xff]
        %v1148 = vld [vmem:[#allocation12 + $0xa4] sm:$0xf]
        %v1149 = vld [vmem:[#allocation12 + $0xa8] sm:$0xff]
        %v1150 = vld [vmem:[#allocation12 + $0xb0] sm:$0xf]
        %v1151 = vld [vmem:[#allocation12 + $0xb4] sm:$0xff]
        %v1152 = vld [vmem:[#allocation12 + $0xbc] sm:$0xf]
        %v1185 = vunpack.c.l.b16 %v1121
        %v1186 = vunpack.c.h.b16 %v1121
        %v1187 = vunpack.c.l.b16 %v1122
        %v1188 = vunpack.c.l.b16 %v1123
        %v1189 = vunpack.c.h.b16 %v1123
        %v1190 = vunpack.c.l.b16 %v1124
        %v1191 = vunpack.c.l.b16 %v1125
        %v1192 = vunpack.c.h.b16 %v1125
        %v1193 = vunpack.c.l.b16 %v1126
        %v1194 = vunpack.c.l.b16 %v1127
        %v1195 = vunpack.c.h.b16 %v1127
        %v1196 = vunpack.c.l.b16 %v1128
        %v1197 = vunpack.c.l.b16 %v1129
        %v1198 = vunpack.c.h.b16 %v1129
        %v1199 = vunpack.c.l.b16 %v1130
        %v1200 = vunpack.c.l.b16 %v1131
        %v1201 = vunpack.c.h.b16 %v1131
        %v1202 = vunpack.c.l.b16 %v1132
        %v1203 = vunpack.c.l.b16 %v1133
        %v1204 = vunpack.c.h.b16 %v1133
        %v1205 = vunpack.c.l.b16 %v1134
        %v1206 = vunpack.c.l.b16 %v1135
        %v1207 = vunpack.c.h.b16 %v1135
        %v1208 = vunpack.c.l.b16 %v1136
        %v1209 = vunpack.c.l.b16 %v1137
        %v1210 = vunpack.c.h.b16 %v1137
        %v1211 = vunpack.c.l.b16 %v1138
        %v1212 = vunpack.c.l.b16 %v1139
        %v1213 = vunpack.c.h.b16 %v1139
        %v1214 = vunpack.c.l.b16 %v1140
        %v1215 = vunpack.c.l.b16 %v1141
        %v1216 = vunpack.c.h.b16 %v1141
        %v1217 = vunpack.c.l.b16 %v1142
        %v1218 = vunpack.c.l.b16 %v1143
        %v1219 = vunpack.c.h.b16 %v1143
        %v1220 = vunpack.c.l.b16 %v1144
        %v1221 = vunpack.c.l.b16 %v1145
        %v1222 = vunpack.c.h.b16 %v1145
        %v1223 = vunpack.c.l.b16 %v1146
        %v1224 = vunpack.c.l.b16 %v1147
        %v1225 = vunpack.c.h.b16 %v1147
        %v1226 = vunpack.c.l.b16 %v1148
        %v1227 = vunpack.c.l.b16 %v1149
        %v1228 = vunpack.c.h.b16 %v1149
        %v1229 = vunpack.c.l.b16 %v1150
        %v1230 = vunpack.c.l.b16 %v1151
        %v1231 = vunpack.c.h.b16 %v1151
        %v1232 = vunpack.c.l.b16 %v1152
        %v1233 = vpack.c.b16 %v1188, %v1185
        %v1234 = vpack.c.b16 %v1189, %v1186
        %v1235 = vpack.c.b16 %v1190, %v1187
        %v1236 = vpack.c.b16 %v1194, %v1191
        %v1237 = vpack.c.b16 %v1195, %v1192
        %v1238 = vpack.c.b16 %v1196, %v1193
        %v1239 = vpack.c.b16 %v1200, %v1197
        %v1240 = vpack.c.b16 %v1201, %v1198
        %v1241 = vpack.c.b16 %v1202, %v1199
        %v1242 = vpack.c.b16 %v1206, %v1203
        %v1243 = vpack.c.b16 %v1207, %v1204
        %v1244 = vpack.c.b16 %v1208, %v1205
        %v1245 = vpack.c.b16 %v1212, %v1209
        %v1246 = vpack.c.b16 %v1213, %v1210
        %v1247 = vpack.c.b16 %v1214, %v1211
        %v1248 = vpack.c.b16 %v1218, %v1215
        %v1249 = vpack.c.b16 %v1219, %v1216
        %v1250 = vpack.c.b16 %v1220, %v1217
        %v1251 = vpack.c.b16 %v1224, %v1221
        %v1252 = vpack.c.b16 %v1225, %v1222
        %v1253 = vpack.c.b16 %v1226, %v1223
        %v1254 = vpack.c.b16 %v1230, %v1227
        %v1255 = vpack.c.b16 %v1231, %v1228
        %v1256 = vpack.c.b16 %v1232, %v1229
        %1281 = vmatprep.subr.bf16.mxu0 %v1255
        %1282 = vmatpush1.bf16.msra.mxu0 %v1254
        %1283 = vmatprep.subr.bf16.mxu0 %v1252
        %1284 = vmatpush1.bf16.msra.mxu0 %v1251
        %1285 = vmatprep.subr.bf16.mxu0 %v1249
        %1286 = vmatpush1.bf16.msra.mxu0 %v1248
        %1287 = vmatprep.subr.bf16.mxu0 %v1246
        %1288 = vmatpush1.bf16.msra.mxu0 %v1245
        %1289 = vmatprep.subr.bf16.mxu0 %v1243
        %1290 = vmatpush1.bf16.msra.mxu0 %v1242
        %1291 = vmatprep.subr.bf16.mxu0 %v1240
        %1292 = vmatpush1.bf16.msra.mxu0 %v1239
        %1293 = vmatprep.subr.bf16.mxu0 %v1237
        %1294 = vmatpush1.bf16.msra.mxu0 %v1236
        %1295 = vmatprep.subr.bf16.mxu0 %v1234
        %1296 = vmatpush1.bf16.msra.mxu0 %v1233
        %1297 = vmatprep.subr.bf16.mxu0 0
        %1298 = vmatpush2.bf16.msra.mxu0 0
        %1299 = vmatprep.subr.bf16.mxu0 0
        %1300 = vmatpush2.bf16.msra.mxu0 0
        %1301 = vmatprep.subr.bf16.mxu0 0
        %1302 = vmatpush2.bf16.msra.mxu0 0
        %1303 = vmatprep.subr.bf16.mxu0 0
        %1304 = vmatpush2.bf16.msra.mxu0 0
        %1305 = vmatprep.subr.bf16.mxu0 0
        %1306 = vmatpush2.bf16.msra.mxu0 0
        %1307 = vmatprep.subr.bf16.mxu0 0
        %1308 = vmatpush2.bf16.msra.mxu0 0
        %1309 = vmatprep.subr.bf16.mxu0 0
        %1310 = vmatpush2.bf16.msra.mxu0 0
        %1311 = vmatprep.subr.bf16.mxu0 0
        %1312 = vmatpush2.bf16.msra.mxu0 0
        %1313 = vmatprep.mubr.bf16.mxu0 0
        %1314 = vmatmul.mubr.bf16.gmra.mxu0 %v1120
        %v1315 = vpop.f32.mrf.mxu0
        %v1316 = vadd.f32 0.0, %v1315
        %v1317 = vpop.f32.mrf.mxu0
        %v1318 = vadd.f32 0.0, %v1317
        %v1319 = vpop.f32.mrf.mxu0
        %v1320 = vpop.f32.mrf.mxu0
        %1321 = vdwg.mxu0
        %1322 = vmatprep.subr.bf16.mxu0 0
        %1323 = vmatpush1.bf16.msra.mxu0 %v1256
        %1324 = vmatprep.subr.bf16.mxu0 0
        %1325 = vmatpush1.bf16.msra.mxu0 %v1253
        %1326 = vmatprep.subr.bf16.mxu0 0
        %1327 = vmatpush1.bf16.msra.mxu0 %v1250
        %1328 = vmatprep.subr.bf16.mxu0 0
        %1329 = vmatpush1.bf16.msra.mxu0 %v1247
        %1330 = vmatprep.subr.bf16.mxu0 0
        %1331 = vmatpush1.bf16.msra.mxu0 %v1244
        %1332 = vmatprep.subr.bf16.mxu0 0
        %1333 = vmatpush1.bf16.msra.mxu0 %v1241
        %1334 = vmatprep.subr.bf16.mxu0 0
        %1335 = vmatpush1.bf16.msra.mxu0 %v1238
        %1336 = vmatprep.subr.bf16.mxu0 0
        %1337 = vmatpush1.bf16.msra.mxu0 %v1235
        %1338 = vmatprep.subr.bf16.mxu0 0
        %1339 = vmatpush2.bf16.msra.mxu0 0
        %1340 = vmatprep.subr.bf16.mxu0 0
        %1341 = vmatpush2.bf16.msra.mxu0 0
        %1342 = vmatprep.subr.bf16.mxu0 0
        %1343 = vmatpush2.bf16.msra.mxu0 0
        %1344 = vmatprep.subr.bf16.mxu0 0
        %1345 = vmatpush2.bf16.msra.mxu0 0
        %1346 = vmatprep.subr.bf16.mxu0 0
        %1347 = vmatpush2.bf16.msra.mxu0 0
        %1348 = vmatprep.subr.bf16.mxu0 0
        %1349 = vmatpush2.bf16.msra.mxu0 0
        %1350 = vmatprep.subr.bf16.mxu0 0
        %1351 = vmatpush2.bf16.msra.mxu0 0
        %1352 = vmatprep.subr.bf16.mxu0 0
        %1353 = vmatpush2.bf16.msra.mxu0 0
        %1354 = vmatprep.mubr.bf16.mxu0 0
        %1355 = vmatmul.mubr.bf16.gmra.mxu0 %v1120
        %v1356 = vpop.f32.mrf.mxu0
        %v1357 = vadd.f32 0.0, %v1356
        %v1358 = vpop.f32.mrf.mxu0
        %v1359 = vpop.f32.mrf.mxu0
        %v1360 = vpop.f32.mrf.mxu0
        %1361 = vdwg.mxu0
        %v1362 = vpack.c.bf16 %v1316, %v1316
        %v1363 = vpack.c.bf16 %v1318, %v1318
        %v1364 = vpack.c.bf16 %v1357, %v1357
        %v1365 = vld [vmem:[#allocation10] sm:$0xf]
        %v1366 = vld [vmem:[#allocation10 + $0x4] sm:$0xf]
        %s1367 = scalar_lea.vmem [#allocation10], 8
        %v1368 = vld [vmem:[%s1367] sm:$0xf]
        %v1369 = vld [vmem:[%s1367 + $0x4] sm:$0xf]
        %v1372 = vunpack.c.l.b16 %v1368
        %v1373 = vunpack.c.l.b16 %v1369
        %v1374 = vpack.c.b16 %v1373, %v1372
        %v1376 = vsel %vm968, %v1374, 0
        %v1379 = vsel %vm972, %v1363, 0
        %1381 = vmatprep.subr.bf16.mxu0 0
        %1382 = vmatpush1.bf16.msra.mxu0 0
        %1383 = vmatprep.subr.bf16.mxu0 0
        %1384 = vmatpush1.bf16.msra.mxu0 0
        %1385 = vmatprep.subr.bf16.mxu0 0
        %1386 = vmatpush1.bf16.msra.mxu0 0
        %1387 = vmatprep.subr.bf16.mxu0 0
        %1388 = vmatpush1.bf16.msra.mxu0 0
        %1389 = vmatprep.subr.bf16.mxu0 0
        %1390 = vmatpush1.bf16.msra.mxu0 0
        %1391 = vmatprep.subr.bf16.mxu0 0
        %1392 = vmatpush1.bf16.msra.mxu0 0
        %1393 = vmatprep.subr.bf16.mxu0 0
        %1394 = vmatpush1.bf16.msra.mxu0 0
        %1395 = vmatprep.subr.bf16.mxu0 0
        %1396 = vmatpush1.bf16.msra.mxu0 %v1379
        %1397 = vmatprep.subr.bf16.mxu0 0
        %1398 = vmatpush2.bf16.msra.mxu0 0
        %1399 = vmatprep.subr.bf16.mxu0 0
        %1400 = vmatpush2.bf16.msra.mxu0 0
        %1401 = vmatprep.subr.bf16.mxu0 0
        %1402 = vmatpush2.bf16.msra.mxu0 0
        %1403 = vmatprep.subr.bf16.mxu0 0
        %1404 = vmatpush2.bf16.msra.mxu0 0
        %1405 = vmatprep.subr.bf16.mxu0 0
        %1406 = vmatpush2.bf16.msra.mxu0 0
        %1407 = vmatprep.subr.bf16.mxu0 0
        %1408 = vmatpush2.bf16.msra.mxu0 0
        %1409 = vmatprep.subr.bf16.mxu0 0
        %1410 = vmatpush2.bf16.msra.mxu0 0
        %1411 = vmatprep.subr.bf16.mxu0 0
        %1412 = vmatpush2.bf16.msra.mxu0 0
        %1413 = vmatprep.mubr.bf16.mxu0 0
        %1414 = vmatmul.mubr.bf16.gmra.mxu0 %v1376
        %v1415 = vpop.f32.mrf.mxu0
        %v1416 = vadd.f32 0.0, %v1415
        %v1417 = vpop.f32.mrf.mxu0
        %v1418 = vpop.f32.mrf.mxu0
        %v1419 = vadd.f32 0.0, %v1418
        %v1420 = vpop.f32.mrf.mxu0
        %1421 = vdwg.mxu0
        %v1424 = vunpack.c.l.b16 %v1365
        %v1425 = vunpack.c.l.b16 %v1366
        %v1426 = vpack.c.b16 %v1425, %v1424
        %v1428 = vsel %vm968, %v1426, 0
        %v1431 = vsel %vm972, %v1362, 0
        %1433 = vmatprep.subr.bf16.mxu0 0
        %1434 = vmatpush1.bf16.msra.mxu0 0
        %1435 = vmatprep.subr.bf16.mxu0 0
        %1436 = vmatpush1.bf16.msra.mxu0 0
        %1437 = vmatprep.subr.bf16.mxu0 0
        %1438 = vmatpush1.bf16.msra.mxu0 0
        %1439 = vmatprep.subr.bf16.mxu0 0
        %1440 = vmatpush1.bf16.msra.mxu0 0
        %1441 = vmatprep.subr.bf16.mxu0 0
        %1442 = vmatpush1.bf16.msra.mxu0 0
        %1443 = vmatprep.subr.bf16.mxu0 0
        %1444 = vmatpush1.bf16.msra.mxu0 0
        %1445 = vmatprep.subr.bf16.mxu0 0
        %1446 = vmatpush1.bf16.msra.mxu0 0
        %1447 = vmatprep.subr.bf16.mxu0 0
        %1448 = vmatpush1.bf16.msra.mxu0 %v1431
        %1449 = vmatprep.subr.bf16.mxu0 0
        %1450 = vmatpush2.bf16.msra.mxu0 0
        %1451 = vmatprep.subr.bf16.mxu0 0
        %1452 = vmatpush2.bf16.msra.mxu0 0
        %1453 = vmatprep.subr.bf16.mxu0 0
        %1454 = vmatpush2.bf16.msra.mxu0 0
        %1455 = vmatprep.subr.bf16.mxu0 0
        %1456 = vmatpush2.bf16.msra.mxu0 0
        %1457 = vmatprep.subr.bf16.mxu0 0
        %1458 = vmatpush2.bf16.msra.mxu0 0
        %1459 = vmatprep.subr.bf16.mxu0 0
        %1460 = vmatpush2.bf16.msra.mxu0 0
        %1461 = vmatprep.subr.bf16.mxu0 0
        %1462 = vmatpush2.bf16.msra.mxu0 0
        %1463 = vmatprep.subr.bf16.mxu0 0
        %1464 = vmatpush2.bf16.msra.mxu0 0
        %1465 = vmatprep.mubr.bf16.mxu0 0
        %1466 = vmatmul.mubr.bf16.gmra.mxu0 %v1428
        %v1467 = vpop.f32.mrf.mxu0
        %v1468 = vadd.f32 %v1416, %v1467
        %v1469 = vpop.f32.mrf.mxu0
        %v1470 = vpop.f32.mrf.mxu0
        %v1471 = vadd.f32 %v1419, %v1470
        %v1472 = vpop.f32.mrf.mxu0
        %1473 = vdwg.mxu0
        %s1474 = scalar_lea.vmem [#allocation10], 16
        %v1475 = vld [vmem:[%s1474] sm:$0xf]
        %v1476 = vld [vmem:[%s1474 + $0x4] sm:$0xf]
        %v1479 = vunpack.c.l.b16 %v1475
        %v1480 = vunpack.c.l.b16 %v1476
        %v1481 = vpack.c.b16 %v1480, %v1479
        %v1483 = vsel %vm968, %v1481, 0
        %v1486 = vsel %vm972, %v1364, 0
        %1488 = vmatprep.subr.bf16.mxu0 0
        %1489 = vmatpush1.bf16.msra.mxu0 0
        %1490 = vmatprep.subr.bf16.mxu0 0
        %1491 = vmatpush1.bf16.msra.mxu0 0
        %1492 = vmatprep.subr.bf16.mxu0 0
        %1493 = vmatpush1.bf16.msra.mxu0 0
        %1494 = vmatprep.subr.bf16.mxu0 0
        %1495 = vmatpush1.bf16.msra.mxu0 0
        %1496 = vmatprep.subr.bf16.mxu0 0
        %1497 = vmatpush1.bf16.msra.mxu0 0
        %1498 = vmatprep.subr.bf16.mxu0 0
        %1499 = vmatpush1.bf16.msra.mxu0 0
        %1500 = vmatprep.subr.bf16.mxu0 0
        %1501 = vmatpush1.bf16.msra.mxu0 0
        %1502 = vmatprep.subr.bf16.mxu0 0
        %1503 = vmatpush1.bf16.msra.mxu0 %v1486
        %1504 = vmatprep.subr.bf16.mxu0 0
        %1505 = vmatpush2.bf16.msra.mxu0 0
        %1506 = vmatprep.subr.bf16.mxu0 0
        %1507 = vmatpush2.bf16.msra.mxu0 0
        %1508 = vmatprep.subr.bf16.mxu0 0
        %1509 = vmatpush2.bf16.msra.mxu0 0
        %1510 = vmatprep.subr.bf16.mxu0 0
        %1511 = vmatpush2.bf16.msra.mxu0 0
        %1512 = vmatprep.subr.bf16.mxu0 0
        %1513 = vmatpush2.bf16.msra.mxu0 0
        %1514 = vmatprep.subr.bf16.mxu0 0
        %1515 = vmatpush2.bf16.msra.mxu0 0
        %1516 = vmatprep.subr.bf16.mxu0 0
        %1517 = vmatpush2.bf16.msra.mxu0 0
        %1518 = vmatprep.subr.bf16.mxu0 0
        %1519 = vmatpush2.bf16.msra.mxu0 0
        %1520 = vmatprep.mubr.bf16.mxu0 0
        %1521 = vmatmul.mubr.bf16.gmra.mxu0 %v1483
        %v1522 = vpop.f32.mrf.mxu0
        %v1523 = vadd.f32 0.0, %v1522
        %v1524 = vpop.f32.mrf.mxu0
        %v1525 = vpop.f32.mrf.mxu0
        %v1526 = vadd.f32 0.0, %v1525
        %v1527 = vpop.f32.mrf.mxu0
        %1528 = vdwg.mxu0
        %v1529 = vadd.f32 %v1468, %v1523
        %v1530 = vadd.f32 %v1471, %v1526
        %v1531 = vld [vmem:[%s8] sm:$0x1]
        %v1533 = vlaneseq
        %v1534 = vshrl.u32 %v1533, 7
        %v1535 = vsub.s32 0, %v1534
        %v1536 = vrot.slane %v1531, %v1535
        %v1538 = vadd.f32 %v1529, %v1536
        %v1539 = vadd.f32 %v1530, %v1536
        %v1540 = vmax.f32 %v1538, 0.0
        %v1541 = vmax.f32 %v1539, 0.0
        %v1542 = vpack.c.bf16 %v1541, %v1540
        %v1543 = vld [vmem:[#allocation15] sm:$0xff]
        %v1544 = vld [vmem:[#allocation15 + $0x8] sm:$0xf]
        %v1545 = vld [vmem:[#allocation15 + $0xc] sm:$0xff]
        %v1546 = vld [vmem:[#allocation15 + $0x14] sm:$0xf]
        %v1547 = vld [vmem:[#allocation15 + $0x18] sm:$0xff]
        %v1548 = vld [vmem:[#allocation15 + $0x20] sm:$0xf]
        %v1549 = vld [vmem:[#allocation15 + $0x24] sm:$0xff]
        %v1550 = vld [vmem:[#allocation15 + $0x2c] sm:$0xf]
        %v1551 = vld [vmem:[#allocation15 + $0x30] sm:$0xff]
        %v1552 = vld [vmem:[#allocation15 + $0x38] sm:$0xf]
        %v1553 = vld [vmem:[#allocation15 + $0x3c] sm:$0xff]
        %v1554 = vld [vmem:[#allocation15 + $0x44] sm:$0xf]
        %v1555 = vld [vmem:[#allocation15 + $0x48] sm:$0xff]
        %v1556 = vld [vmem:[#allocation15 + $0x50] sm:$0xf]
        %v1557 = vld [vmem:[#allocation15 + $0x54] sm:$0xff]
        %v1558 = vld [vmem:[#allocation15 + $0x5c] sm:$0xf]
        %v1559 = vld [vmem:[#allocation15 + $0x60] sm:$0xff]
        %v1560 = vld [vmem:[#allocation15 + $0x68] sm:$0xf]
        %v1561 = vld [vmem:[#allocation15 + $0x6c] sm:$0xff]
        %v1562 = vld [vmem:[#allocation15 + $0x74] sm:$0xf]
        %v1563 = vld [vmem:[#allocation15 + $0x78] sm:$0xff]
        %v1564 = vld [vmem:[#allocation15 + $0x80] sm:$0xf]
        %v1565 = vld [vmem:[#allocation15 + $0x84] sm:$0xff]
        %v1566 = vld [vmem:[#allocation15 + $0x8c] sm:$0xf]
        %v1567 = vld [vmem:[#allocation15 + $0x90] sm:$0xff]
        %v1568 = vld [vmem:[#allocation15 + $0x98] sm:$0xf]
        %v1569 = vld [vmem:[#allocation15 + $0x9c] sm:$0xff]
        %v1570 = vld [vmem:[#allocation15 + $0xa4] sm:$0xf]
        %v1571 = vld [vmem:[#allocation15 + $0xa8] sm:$0xff]
        %v1572 = vld [vmem:[#allocation15 + $0xb0] sm:$0xf]
        %v1573 = vld [vmem:[#allocation15 + $0xb4] sm:$0xff]
        %v1574 = vld [vmem:[#allocation15 + $0xbc] sm:$0xf]
        %v1607 = vunpack.c.l.b16 %v1543
        %v1608 = vunpack.c.h.b16 %v1543
        %v1609 = vunpack.c.l.b16 %v1544
        %v1610 = vunpack.c.l.b16 %v1545
        %v1611 = vunpack.c.h.b16 %v1545
        %v1612 = vunpack.c.l.b16 %v1546
        %v1613 = vunpack.c.l.b16 %v1547
        %v1614 = vunpack.c.h.b16 %v1547
        %v1615 = vunpack.c.l.b16 %v1548
        %v1616 = vunpack.c.l.b16 %v1549
        %v1617 = vunpack.c.h.b16 %v1549
        %v1618 = vunpack.c.l.b16 %v1550
        %v1619 = vunpack.c.l.b16 %v1551
        %v1620 = vunpack.c.h.b16 %v1551
        %v1621 = vunpack.c.l.b16 %v1552
        %v1622 = vunpack.c.l.b16 %v1553
        %v1623 = vunpack.c.h.b16 %v1553
        %v1624 = vunpack.c.l.b16 %v1554
        %v1625 = vunpack.c.l.b16 %v1555
        %v1626 = vunpack.c.h.b16 %v1555
        %v1627 = vunpack.c.l.b16 %v1556
        %v1628 = vunpack.c.l.b16 %v1557
        %v1629 = vunpack.c.h.b16 %v1557
        %v1630 = vunpack.c.l.b16 %v1558
        %v1631 = vunpack.c.l.b16 %v1559
        %v1632 = vunpack.c.h.b16 %v1559
        %v1633 = vunpack.c.l.b16 %v1560
        %v1634 = vunpack.c.l.b16 %v1561
        %v1635 = vunpack.c.h.b16 %v1561
        %v1636 = vunpack.c.l.b16 %v1562
        %v1637 = vunpack.c.l.b16 %v1563
        %v1638 = vunpack.c.h.b16 %v1563
        %v1639 = vunpack.c.l.b16 %v1564
        %v1640 = vunpack.c.l.b16 %v1565
        %v1641 = vunpack.c.h.b16 %v1565
        %v1642 = vunpack.c.l.b16 %v1566
        %v1643 = vunpack.c.l.b16 %v1567
        %v1644 = vunpack.c.h.b16 %v1567
        %v1645 = vunpack.c.l.b16 %v1568
        %v1646 = vunpack.c.l.b16 %v1569
        %v1647 = vunpack.c.h.b16 %v1569
        %v1648 = vunpack.c.l.b16 %v1570
        %v1649 = vunpack.c.l.b16 %v1571
        %v1650 = vunpack.c.h.b16 %v1571
        %v1651 = vunpack.c.l.b16 %v1572
        %v1652 = vunpack.c.l.b16 %v1573
        %v1653 = vunpack.c.h.b16 %v1573
        %v1654 = vunpack.c.l.b16 %v1574
        %v1655 = vpack.c.b16 %v1610, %v1607
        %v1656 = vpack.c.b16 %v1611, %v1608
        %v1657 = vpack.c.b16 %v1612, %v1609
        %v1658 = vpack.c.b16 %v1616, %v1613
        %v1659 = vpack.c.b16 %v1617, %v1614
        %v1660 = vpack.c.b16 %v1618, %v1615
        %v1661 = vpack.c.b16 %v1622, %v1619
        %v1662 = vpack.c.b16 %v1623, %v1620
        %v1663 = vpack.c.b16 %v1624, %v1621
        %v1664 = vpack.c.b16 %v1628, %v1625
        %v1665 = vpack.c.b16 %v1629, %v1626
        %v1666 = vpack.c.b16 %v1630, %v1627
        %v1667 = vpack.c.b16 %v1634, %v1631
        %v1668 = vpack.c.b16 %v1635, %v1632
        %v1669 = vpack.c.b16 %v1636, %v1633
        %v1670 = vpack.c.b16 %v1640, %v1637
        %v1671 = vpack.c.b16 %v1641, %v1638
        %v1672 = vpack.c.b16 %v1642, %v1639
        %v1673 = vpack.c.b16 %v1646, %v1643
        %v1674 = vpack.c.b16 %v1647, %v1644
        %v1675 = vpack.c.b16 %v1648, %v1645
        %v1676 = vpack.c.b16 %v1652, %v1649
        %v1677 = vpack.c.b16 %v1653, %v1650
        %v1678 = vpack.c.b16 %v1654, %v1651
        %1703 = vmatprep.subr.bf16.mxu0 %v1677
        %1704 = vmatpush1.bf16.msra.mxu0 %v1676
        %1705 = vmatprep.subr.bf16.mxu0 %v1674
        %1706 = vmatpush1.bf16.msra.mxu0 %v1673
        %1707 = vmatprep.subr.bf16.mxu0 %v1671
        %1708 = vmatpush1.bf16.msra.mxu0 %v1670
        %1709 = vmatprep.subr.bf16.mxu0 %v1668
        %1710 = vmatpush1.bf16.msra.mxu0 %v1667
        %1711 = vmatprep.subr.bf16.mxu0 %v1665
        %1712 = vmatpush1.bf16.msra.mxu0 %v1664
        %1713 = vmatprep.subr.bf16.mxu0 %v1662
        %1714 = vmatpush1.bf16.msra.mxu0 %v1661
        %1715 = vmatprep.subr.bf16.mxu0 %v1659
        %1716 = vmatpush1.bf16.msra.mxu0 %v1658
        %1717 = vmatprep.subr.bf16.mxu0 %v1656
        %1718 = vmatpush1.bf16.msra.mxu0 %v1655
        %1719 = vmatprep.subr.bf16.mxu0 0
        %1720 = vmatpush2.bf16.msra.mxu0 0
        %1721 = vmatprep.subr.bf16.mxu0 0
        %1722 = vmatpush2.bf16.msra.mxu0 0
        %1723 = vmatprep.subr.bf16.mxu0 0
        %1724 = vmatpush2.bf16.msra.mxu0 0
        %1725 = vmatprep.subr.bf16.mxu0 0
        %1726 = vmatpush2.bf16.msra.mxu0 0
        %1727 = vmatprep.subr.bf16.mxu0 0
        %1728 = vmatpush2.bf16.msra.mxu0 0
        %1729 = vmatprep.subr.bf16.mxu0 0
        %1730 = vmatpush2.bf16.msra.mxu0 0
        %1731 = vmatprep.subr.bf16.mxu0 0
        %1732 = vmatpush2.bf16.msra.mxu0 0
        %1733 = vmatprep.subr.bf16.mxu0 0
        %1734 = vmatpush2.bf16.msra.mxu0 0
        %1735 = vmatprep.mubr.bf16.mxu0 0
        %1736 = vmatmul.mubr.bf16.gmra.mxu0 %v1542
        %v1737 = vpop.f32.mrf.mxu0
        %v1738 = vadd.f32 0.0, %v1737
        %v1739 = vpop.f32.mrf.mxu0
        %v1740 = vadd.f32 0.0, %v1739
        %v1741 = vpop.f32.mrf.mxu0
        %v1742 = vadd.f32 0.0, %v1741
        %v1743 = vpop.f32.mrf.mxu0
        %v1744 = vadd.f32 0.0, %v1743
        %1745 = vdwg.mxu0
        %1746 = vmatprep.subr.bf16.mxu0 0
        %1747 = vmatpush1.bf16.msra.mxu0 %v1678
        %1748 = vmatprep.subr.bf16.mxu0 0
        %1749 = vmatpush1.bf16.msra.mxu0 %v1675
        %1750 = vmatprep.subr.bf16.mxu0 0
        %1751 = vmatpush1.bf16.msra.mxu0 %v1672
        %1752 = vmatprep.subr.bf16.mxu0 0
        %1753 = vmatpush1.bf16.msra.mxu0 %v1669
        %1754 = vmatprep.subr.bf16.mxu0 0
        %1755 = vmatpush1.bf16.msra.mxu0 %v1666
        %1756 = vmatprep.subr.bf16.mxu0 0
        %1757 = vmatpush1.bf16.msra.mxu0 %v1663
        %1758 = vmatprep.subr.bf16.mxu0 0
        %1759 = vmatpush1.bf16.msra.mxu0 %v1660
        %1760 = vmatprep.subr.bf16.mxu0 0
        %1761 = vmatpush1.bf16.msra.mxu0 %v1657
        %1762 = vmatprep.subr.bf16.mxu0 0
        %1763 = vmatpush2.bf16.msra.mxu0 0
        %1764 = vmatprep.subr.bf16.mxu0 0
        %1765 = vmatpush2.bf16.msra.mxu0 0
        %1766 = vmatprep.subr.bf16.mxu0 0
        %1767 = vmatpush2.bf16.msra.mxu0 0
        %1768 = vmatprep.subr.bf16.mxu0 0
        %1769 = vmatpush2.bf16.msra.mxu0 0
        %1770 = vmatprep.subr.bf16.mxu0 0
        %1771 = vmatpush2.bf16.msra.mxu0 0
        %1772 = vmatprep.subr.bf16.mxu0 0
        %1773 = vmatpush2.bf16.msra.mxu0 0
        %1774 = vmatprep.subr.bf16.mxu0 0
        %1775 = vmatpush2.bf16.msra.mxu0 0
        %1776 = vmatprep.subr.bf16.mxu0 0
        %1777 = vmatpush2.bf16.msra.mxu0 0
        %1778 = vmatprep.mubr.bf16.mxu0 0
        %1779 = vmatmul.mubr.bf16.gmra.mxu0 %v1542
        %v1780 = vpop.f32.mrf.mxu0
        %v1781 = vadd.f32 0.0, %v1780
        %v1782 = vpop.f32.mrf.mxu0
        %v1783 = vpop.f32.mrf.mxu0
        %v1784 = vadd.f32 0.0, %v1783
        %v1785 = vpop.f32.mrf.mxu0
        %1786 = vdwg.mxu0
        %v1787 = vpack.c.bf16 %v1742, %v1738
        %v1788 = vpack.c.bf16 %v1744, %v1740
        %v1789 = vpack.c.bf16 %v1784, %v1781
        %v1790 = vld [vmem:[#allocation13] sm:$0xf]
        %v1791 = vld [vmem:[#allocation13 + $0x4] sm:$0xf]
        %v1792 = vld [vmem:[#allocation13 + $0x8] sm:$0xf]
        %v1793 = vld [vmem:[#allocation13 + $0xc] sm:$0xf]
        %s1794 = scalar_lea.vmem [#allocation13], 16
        %v1795 = vld [vmem:[%s1794] sm:$0xf]
        %v1796 = vld [vmem:[%s1794 + $0x4] sm:$0xf]
        %v1797 = vld [vmem:[%s1794 + $0x8] sm:$0xf]
        %v1798 = vld [vmem:[%s1794 + $0xc] sm:$0xf]
        %v1803 = vunpack.c.l.b16 %v1795
        %v1804 = vunpack.c.l.b16 %v1796
        %v1805 = vunpack.c.l.b16 %v1797
        %v1806 = vunpack.c.l.b16 %v1798
        %v1807 = vpack.c.b16 %v1804, %v1803
        %v1808 = vpack.c.b16 %v1806, %v1805
        %vm1809 = vcmask 130048
        %v1811 = vsel %vm1809, %v1807, 0
        %v1814 = vsel %vm1809, %v1808, 0
        %1816 = vmatprep.subr.bf16.mxu0 0
        %1817 = vmatpush1.bf16.msra.mxu0 0
        %1818 = vmatprep.subr.bf16.mxu0 0
        %1819 = vmatpush1.bf16.msra.mxu0 0
        %1820 = vmatprep.subr.bf16.mxu0 0
        %1821 = vmatpush1.bf16.msra.mxu0 0
        %1822 = vmatprep.subr.bf16.mxu0 0
        %1823 = vmatpush1.bf16.msra.mxu0 0
        %1824 = vmatprep.subr.bf16.mxu0 0
        %1825 = vmatpush1.bf16.msra.mxu0 0
        %1826 = vmatprep.subr.bf16.mxu0 0
        %1827 = vmatpush1.bf16.msra.mxu0 0
        %1828 = vmatprep.subr.bf16.mxu0 0
        %1829 = vmatpush1.bf16.msra.mxu0 0
        %1830 = vmatprep.subr.bf16.mxu0 0
        %1831 = vmatpush1.bf16.msra.mxu0 %v1788
        %1832 = vmatprep.subr.bf16.mxu0 0
        %1833 = vmatpush2.bf16.msra.mxu0 0
        %1834 = vmatprep.subr.bf16.mxu0 0
        %1835 = vmatpush2.bf16.msra.mxu0 0
        %1836 = vmatprep.subr.bf16.mxu0 0
        %1837 = vmatpush2.bf16.msra.mxu0 0
        %1838 = vmatprep.subr.bf16.mxu0 0
        %1839 = vmatpush2.bf16.msra.mxu0 0
        %1840 = vmatprep.subr.bf16.mxu0 0
        %1841 = vmatpush2.bf16.msra.mxu0 0
        %1842 = vmatprep.subr.bf16.mxu0 0
        %1843 = vmatpush2.bf16.msra.mxu0 0
        %1844 = vmatprep.subr.bf16.mxu0 0
        %1845 = vmatpush2.bf16.msra.mxu0 0
        %1846 = vmatprep.subr.bf16.mxu0 0
        %1847 = vmatpush2.bf16.msra.mxu0 0
        %1848 = vmatprep.mubr.bf16.mxu0 0
        %1849 = vmatmul.mubr.bf16.gmra.mxu0 %v1811
        %v1850 = vpop.f32.mrf.mxu0
        %v1851 = vadd.f32 0.0, %v1850
        %v1852 = vpop.f32.mrf.mxu0
        %v1853 = vpop.f32.mrf.mxu0
        %v1854 = vadd.f32 0.0, %v1853
        %v1855 = vpop.f32.mrf.mxu0
        %1856 = vmatprep.mubr.bf16.mxu0 0
        %1857 = vmatmul.mubr.bf16.gmra.mxu0 %v1814
        %v1858 = vpop.f32.mrf.mxu0
        %v1859 = vadd.f32 0.0, %v1858
        %v1860 = vpop.f32.mrf.mxu0
        %v1861 = vpop.f32.mrf.mxu0
        %v1862 = vadd.f32 0.0, %v1861
        %v1863 = vpop.f32.mrf.mxu0
        %1864 = vdwg.mxu0
        %v1869 = vunpack.c.l.b16 %v1790
        %v1870 = vunpack.c.l.b16 %v1791
        %v1871 = vunpack.c.l.b16 %v1792
        %v1872 = vunpack.c.l.b16 %v1793
        %v1873 = vpack.c.b16 %v1870, %v1869
        %v1874 = vpack.c.b16 %v1872, %v1871
        %v1876 = vsel %vm1809, %v1873, 0
        %v1879 = vsel %vm1809, %v1874, 0
        %1881 = vmatprep.subr.bf16.mxu0 0
        %1882 = vmatpush1.bf16.msra.mxu0 0
        %1883 = vmatprep.subr.bf16.mxu0 0
        %1884 = vmatpush1.bf16.msra.mxu0 0
        %1885 = vmatprep.subr.bf16.mxu0 0
        %1886 = vmatpush1.bf16.msra.mxu0 0
        %1887 = vmatprep.subr.bf16.mxu0 0
        %1888 = vmatpush1.bf16.msra.mxu0 0
        %1889 = vmatprep.subr.bf16.mxu0 0
        %1890 = vmatpush1.bf16.msra.mxu0 0
        %1891 = vmatprep.subr.bf16.mxu0 0
        %1892 = vmatpush1.bf16.msra.mxu0 0
        %1893 = vmatprep.subr.bf16.mxu0 0
        %1894 = vmatpush1.bf16.msra.mxu0 0
        %1895 = vmatprep.subr.bf16.mxu0 0
        %1896 = vmatpush1.bf16.msra.mxu0 %v1787
        %1897 = vmatprep.subr.bf16.mxu0 0
        %1898 = vmatpush2.bf16.msra.mxu0 0
        %1899 = vmatprep.subr.bf16.mxu0 0
        %1900 = vmatpush2.bf16.msra.mxu0 0
        %1901 = vmatprep.subr.bf16.mxu0 0
        %1902 = vmatpush2.bf16.msra.mxu0 0
        %1903 = vmatprep.subr.bf16.mxu0 0
        %1904 = vmatpush2.bf16.msra.mxu0 0
        %1905 = vmatprep.subr.bf16.mxu0 0
        %1906 = vmatpush2.bf16.msra.mxu0 0
        %1907 = vmatprep.subr.bf16.mxu0 0
        %1908 = vmatpush2.bf16.msra.mxu0 0
        %1909 = vmatprep.subr.bf16.mxu0 0
        %1910 = vmatpush2.bf16.msra.mxu0 0
        %1911 = vmatprep.subr.bf16.mxu0 0
        %1912 = vmatpush2.bf16.msra.mxu0 0
        %1913 = vmatprep.mubr.bf16.mxu0 0
        %1914 = vmatmul.mubr.bf16.gmra.mxu0 %v1876
        %v1915 = vpop.f32.mrf.mxu0
        %v1916 = vadd.f32 %v1851, %v1915
        %v1917 = vpop.f32.mrf.mxu0
        %v1918 = vpop.f32.mrf.mxu0
        %v1919 = vadd.f32 %v1854, %v1918
        %v1920 = vpop.f32.mrf.mxu0
        %1921 = vmatprep.mubr.bf16.mxu0 0
        %1922 = vmatmul.mubr.bf16.gmra.mxu0 %v1879
        %v1923 = vpop.f32.mrf.mxu0
        %v1924 = vadd.f32 %v1859, %v1923
        %v1925 = vpop.f32.mrf.mxu0
        %v1926 = vpop.f32.mrf.mxu0
        %v1927 = vadd.f32 %v1862, %v1926
        %v1928 = vpop.f32.mrf.mxu0
        %1929 = vdwg.mxu0
        %s1930 = scalar_lea.vmem [#allocation13], 32
        %v1931 = vld [vmem:[%s1930] sm:$0xf]
        %v1932 = vld [vmem:[%s1930 + $0x4] sm:$0xf]
        %v1933 = vld [vmem:[%s1930 + $0x8] sm:$0xf]
        %v1934 = vld [vmem:[%s1930 + $0xc] sm:$0xf]
        %v1939 = vunpack.c.l.b16 %v1931
        %v1940 = vunpack.c.l.b16 %v1932
        %v1941 = vunpack.c.l.b16 %v1933
        %v1942 = vunpack.c.l.b16 %v1934
        %v1943 = vpack.c.b16 %v1940, %v1939
        %v1944 = vpack.c.b16 %v1942, %v1941
        %v1946 = vsel %vm1809, %v1943, 0
        %v1949 = vsel %vm1809, %v1944, 0
        %1951 = vmatprep.subr.bf16.mxu0 0
        %1952 = vmatpush1.bf16.msra.mxu0 0
        %1953 = vmatprep.subr.bf16.mxu0 0
        %1954 = vmatpush1.bf16.msra.mxu0 0
        %1955 = vmatprep.subr.bf16.mxu0 0
        %1956 = vmatpush1.bf16.msra.mxu0 0
        %1957 = vmatprep.subr.bf16.mxu0 0
        %1958 = vmatpush1.bf16.msra.mxu0 0
        %1959 = vmatprep.subr.bf16.mxu0 0
        %1960 = vmatpush1.bf16.msra.mxu0 0
        %1961 = vmatprep.subr.bf16.mxu0 0
        %1962 = vmatpush1.bf16.msra.mxu0 0
        %1963 = vmatprep.subr.bf16.mxu0 0
        %1964 = vmatpush1.bf16.msra.mxu0 0
        %1965 = vmatprep.subr.bf16.mxu0 0
        %1966 = vmatpush1.bf16.msra.mxu0 %v1789
        %1967 = vmatprep.subr.bf16.mxu0 0
        %1968 = vmatpush2.bf16.msra.mxu0 0
        %1969 = vmatprep.subr.bf16.mxu0 0
        %1970 = vmatpush2.bf16.msra.mxu0 0
        %1971 = vmatprep.subr.bf16.mxu0 0
        %1972 = vmatpush2.bf16.msra.mxu0 0
        %1973 = vmatprep.subr.bf16.mxu0 0
        %1974 = vmatpush2.bf16.msra.mxu0 0
        %1975 = vmatprep.subr.bf16.mxu0 0
        %1976 = vmatpush2.bf16.msra.mxu0 0
        %1977 = vmatprep.subr.bf16.mxu0 0
        %1978 = vmatpush2.bf16.msra.mxu0 0
        %1979 = vmatprep.subr.bf16.mxu0 0
        %1980 = vmatpush2.bf16.msra.mxu0 0
        %1981 = vmatprep.subr.bf16.mxu0 0
        %1982 = vmatpush2.bf16.msra.mxu0 0
        %1983 = vmatprep.mubr.bf16.mxu0 0
        %1984 = vmatmul.mubr.bf16.gmra.mxu0 %v1946
        %v1985 = vpop.f32.mrf.mxu0
        %v1986 = vadd.f32 0.0, %v1985
        %v1987 = vpop.f32.mrf.mxu0
        %v1988 = vpop.f32.mrf.mxu0
        %v1989 = vadd.f32 0.0, %v1988
        %v1990 = vpop.f32.mrf.mxu0
        %1991 = vmatprep.mubr.bf16.mxu0 0
        %1992 = vmatmul.mubr.bf16.gmra.mxu0 %v1949
        %v1993 = vpop.f32.mrf.mxu0
        %v1994 = vadd.f32 0.0, %v1993
        %v1995 = vpop.f32.mrf.mxu0
        %v1996 = vpop.f32.mrf.mxu0
        %v1997 = vadd.f32 0.0, %v1996
        %v1998 = vpop.f32.mrf.mxu0
        %1999 = vdwg.mxu0
        %v2000 = vadd.f32 %v1916, %v1986
        %v2001 = vadd.f32 %v1919, %v1989
        %v2002 = vadd.f32 %v1924, %v1994
        %v2003 = vadd.f32 %v1927, %v1997
        %v2004 = vld [vmem:[%s11] sm:$0x1]
        %v2006 = vlaneseq
        %v2007 = vshrl.u32 %v2006, 7
        %v2008 = vsub.s32 0, %v2007
        %v2009 = vrot.slane %v2004, %v2008
        %v2011 = vadd.f32 %v2000, %v2009
        %v2012 = vadd.f32 %v2001, %v2009
        %v2013 = vadd.f32 %v2002, %v2009
        %v2014 = vadd.f32 %v2003, %v2009
        %v2015 = vtanh.pop %v2011
        %v2016 = vtanh.pop %v2012
        %v2017 = vtanh.pop %v2013
        %v2018 = vtanh.pop %v2014
        %2019 = vst [vmem:[%s520] sm:$0xff] %v2015
        %2020 = vst [vmem:[%s520 + $0x8] sm:$0xff] %v2016
        %2021 = vst [vmem:[%s520 + $0x10] sm:$0xff] %v2017
        %2022 = vst [vmem:[%s520 + $0x18] sm:$0xff] %v2018
        %s2023 = smul.u32 4, %s28
        %p2024 = scmp.lt.s32.totalorder %s2023, 7
        %s2025 = scalar_select %p2024, %s2023, 7
        %s2026 = smul.addr %s2025, 8
        %s2027 = scalar_lea.vmem %s12, %s2026
        // Predicated region
        $region105: #{_forward.1} parent=67 // pred_check
          %p2028 = pneg %p298
        $region106: #{_forward.1} parent=67 // pred_check_branch
          %2030 = sbr.rel (%p2028) target = $region108
        $region107: #{_forward.1} parent=67 // pred_region
          %s2031 = smul.u32 4, %s28
        $region108: #{_forward.1} parent=67 // pred_fallthru
          _
      $region68: #{_forward.1} parent=5 // pred_fallthru
        _
      %p2032 = scmp.le.s32.totalorder 2, %s23
      // Predicated region
      $region109: #{_forward.1} parent=5 // pred_check
        %p2033 = pneg %p2032
      $region110: #{_forward.1} parent=5 // pred_check_branch
        %2035 = sbr.rel (%p2033) target = $region112
      $region111: #{_forward.1} parent=5 // pred_region
        %s2036 = ssub.s32 %s23, 2
        // Predicated region
        $region113: #{_forward.1} parent=111 // pred_check
          %p2037 = pneg %p304
        $region114: #{_forward.1} parent=111 // pred_check_branch
          %2039 = sbr.rel (%p2037) target = $region116
        $region115: #{_forward.1} parent=111 // pred_region
          %s2040 = smul.u32 4, %s29
          %p2041 = scmp.lt.s32.totalorder %s2040, 7
          %s2042 = scalar_select %p2041, %s2040, 7
          %s2043 = smul.addr %s2042, 8
          %s2044 = scalar_lea.vmem %s12, %s2043
        $region116: #{_forward.1} parent=111 // pred_fallthru
          _
      $region112: #{_forward.1} parent=5 // pred_fallthru
        _
    $region6: #{_forward.1} parent=1 // loop_footer
      %s27 = sadd.s32 1, %s23
    $region7: #{_forward.1} parent=1 // loop_footer_branch
      %22 = sbr.rel target = $region3
    $region8: #{_forward.1} parent=1 // loop_exit
      _
    %2045 = vsyncpa [#allocation3], 1
    %s2046 = scalar_lea.sflag [#allocation3], 1
    %2047 = vsyncpa %s2046, 1
    %2048 = vsyncpa [#allocation5], 1
    %2049 = vsyncpa [#allocation8], 1
    %2050 = vsyncpa [#allocation11], 1
    %2051 = vsyncpa [#allocation14], 1

</llo_original>
